<compile_context>
chip_gen: v6e
topology: v6e:2x2x1
jax: 0.10.0
libtpu: 0.0.40
codegen_flags: <defaults>
</compile_context>

<pallas_src>
import functools

import jax
import jax.numpy as jnp
from jax import lax
from jax.experimental import pallas as pl
from jax.experimental.pallas import tpu as pltpu


def _gelu(x):
    # tanh-approx GELU (BERT-style), computed in f32
    c = 0.7978845608028654  # sqrt(2/pi)
    return 0.5 * x * (1.0 + jnp.tanh(c * (x + 0.044715 * x * x * x)))


def _layernorm(x, gamma, beta, eps=1e-12):
    mu = jnp.mean(x, axis=-1, keepdims=True)
    var = jnp.mean((x - mu) ** 2, axis=-1, keepdims=True)
    return (x - mu) * lax.rsqrt(var + eps) * gamma + beta


def bert_encoder_kernel(num_heads,
                        x_ref, mb_ref,
                        wqkv_ref, bqkv_ref,
                        wo_ref, bo_ref, g1_ref, be1_ref,
                        w1_ref, b1_ref, w2_ref, b2_ref, g2_ref, be2_ref,
                        o_ref,
                        qkv_ref, ctx_ref):
    """One (batch_tile, layer) grid step: apply one transformer layer to the
    activation carried in the resident output block `o_ref`."""
    layer = pl.program_id(1)
    Bt, S, F = o_ref.shape
    nh = num_heads
    dh = F // nh
    M = Bt * S

    # Load the fresh input only at layer 0; afterwards the activation stays
    # resident in the output VMEM block across the (arbitrary) layer axis.
    @pl.when(layer == 0)
    def _():
        o_ref[...] = x_ref[...]

    x = o_ref[...].astype(jnp.float32).reshape(M, F)   # (Bt*S, F) f32 carry
    xc = x.astype(jnp.bfloat16)

    # ---- fused Q/K/V projection: one (Bt*S, F) x (F, 3F) matmul -------------
    # (1/sqrt(dh) is already folded into the Q columns at pack time.)
    qkv = jnp.dot(xc, wqkv_ref[0],
                  preferred_element_type=jnp.float32) + bqkv_ref[0]   # (M, 3F)
    # Stage in bf16: halves the bytes moved by the per-sequence relayouts.
    qkv_ref[...] = qkv.astype(jnp.bfloat16).reshape(Bt, S, 3 * F)

    # ---- attention: one sequence at a time (bounds the (H,S,S) slab) --------
    # For BERT-base-scale S on v7x, an additional inner head-group loop would
    # cap the live slab at (G, S, S); not needed at these shapes.
    def attn_body(b, carry):
        qkv_s = qkv_ref[b]                               # (S, 3F) bf16
        qkv_t = qkv_s.T.reshape(3, nh, dh, S)            # bf16, (3, H, dh, S)
        q = jnp.swapaxes(qkv_t[0], -1, -2)               # (H, S, dh) bf16
        k_t = qkv_t[1]                                   # (H, dh, S) bf16 (no transpose)
        v_t = qkv_t[2]                                   # (H, dh, S) bf16 (no transpose)

        s = jnp.einsum('hqd,hdk->hqk', q, k_t,
                       preferred_element_type=jnp.float32)    # (H, S, S) f32
        s = s + mb_ref[b]                                # additive key mask (1, S)
        s = s - jnp.max(s, axis=-1, keepdims=True)
        p = jnp.exp(s)                                   # f32 exp (v5e-safe)
        p = p * pl.reciprocal(jnp.sum(p, axis=-1, keepdims=True), approx=True)

        # ctx^T directly in (H, dh, S) layout -> single bf16 (F,S)->(S,F) merge
        ctx_t = jnp.einsum('hdk,hqk->hdq', v_t, p.astype(jnp.bfloat16),
                           preferred_element_type=jnp.float32)  # (H, dh, S)
        ctx_ref[b] = ctx_t.astype(jnp.bfloat16).reshape(F, S).T  # (S, F) bf16
        return carry

    lax.fori_loop(0, Bt, attn_body, 0)

    # ---- output projection + residual + LayerNorm ---------------------------
    ctx = ctx_ref[...].reshape(M, F)                     # (M, F) bf16
    attn = jnp.dot(ctx, wo_ref[0],
                   preferred_element_type=jnp.float32) + bo_ref[0]
    h1 = _layernorm(x + attn, g1_ref[0], be1_ref[0])

    # ---- FFN (GELU) + residual + LayerNorm ----------------------------------
    ff = _gelu(jnp.dot(h1.astype(jnp.bfloat16), w1_ref[0],
                       preferred_element_type=jnp.float32) + b1_ref[0])
    ff = jnp.dot(ff.astype(jnp.bfloat16), w2_ref[0],
                 preferred_element_type=jnp.float32) + b2_ref[0]
    out = _layernorm(h1 + ff, g2_ref[0], be2_ref[0])

    o_ref[...] = out.reshape(Bt, S, F).astype(o_ref.dtype)   # carry / final result


def _pack_layer_params(layer_params, num_heads, matmul_dtype=jnp.bfloat16):
    """Stack per-layer params with a leading layer axis, fuse QKV weights and
    fold the 1/sqrt(d_head) attention scale into the Q projection.  Matmul
    weights are stored in bf16 (halves HBM/VMEM traffic); biases and LN params
    stay in f32 (epilogue math is f32)."""
    F = layer_params[0]['wq'].shape[0]
    dh = F // num_heads
    scale = 1.0 / (dh ** 0.5)

    def stack(fn):
        return jnp.stack([fn(p) for p in layer_params])

    wqkv = stack(lambda p: jnp.concatenate(
        [p['wq'] * scale, p['wk'], p['wv']], axis=1)).astype(matmul_dtype)
    bqkv = stack(lambda p: jnp.concatenate(
        [p['bq'] * scale, p['bk'], p['bv']], axis=1))
    wo = stack(lambda p: p['wo']).astype(matmul_dtype)
    bo = stack(lambda p: p['bo'])
    g1 = stack(lambda p: p['g1'])
    be1 = stack(lambda p: p['be1'])
    w1 = stack(lambda p: p['w1']).astype(matmul_dtype)
    b1 = stack(lambda p: p['b1'])
    w2 = stack(lambda p: p['w2']).astype(matmul_dtype)
    b2 = stack(lambda p: p['b2'])
    g2 = stack(lambda p: p['g2'])
    be2 = stack(lambda p: p['be2'])
    return (wqkv, bqkv, wo, bo, g1, be1, w1, b1, w2, b2, g2, be2)


def _vmem_limit_bytes():
    """Sub-physical VMEM cap: leaves headroom for Mosaic internal scratch and
    pipeline buffers (~54 MiB on v7x's 64 MiB, ~108 MiB on v5e/v6e's 128 MiB)."""
    cap = 128 * 1024 * 1024
    try:
        info = pltpu.get_tpu_info()
        cap = int(getattr(info, "vmem_capacity_bytes", cap)) or cap
    except Exception:
        pass
    return int(cap * 0.85)


def _pick_batch_tile(B, S, F, hid, num_heads, requested=None):
    """Batch-tile heuristic: as large as fits a conservative VMEM budget
    (amortizes per-layer weight DMA), capped at 8.  Override via `requested`
    (e.g. 1-2 on v7x for BERT-base, larger on v5e/v6e)."""
    if requested is None:
        budget = _vmem_limit_bytes()
        # double-buffered bf16 weights per layer
        weight_bytes = 2 * 2 * (F * 3 * F + F * F + 2 * F * hid)
        # one sequence's live softmax slab (scores + probs, f32)
        attn_bytes = num_heads * S * S * 8
        # per-sequence activation footprint (x/out blocks, qkv/ctx staging,
        # f32 temporaries) — deliberately conservative
        per_seq = S * F * 4 * 6 + S * 3 * F * 6 + S * hid * 8
        avail = budget - weight_bytes - attn_bytes
        cap = max(1, int(avail // max(per_seq, 1)))
        requested = min(B, 8, cap)
    bt = max(1, min(int(requested), B))
    while B % bt != 0:          # largest divisor of B not exceeding the request
        bt -= 1
    return bt


def bert_encoder(x, mask, layer_params, num_heads, batch_tile=None):
    """Matches BertEncoder.forward: sequentially apply all transformer layers
    (fused into one pallas_call with a (batch_tile, layer) grid)."""
    B, S, F = x.shape
    L = len(layer_params)
    hid = layer_params[0]['w1'].shape[1]
    assert F % num_heads == 0, "feature_size must be divisible by attention_head_num"

    Bt = _pick_batch_tile(B, S, F, hid, num_heads, batch_tile)
    nb = B // Bt

    if mask is None:
        mask_bias = jnp.zeros((B, 1, S), jnp.float32)
    else:
        # mask: (B, S) with 1 = keep, 0 = pad -> additive bias over key axis.
        mask_bias = (mask.astype(jnp.float32) - 1.0)[:, None, :] * 1e9

    packed = _pack_layer_params(layer_params, num_heads)

    batch_map = lambda b, l: (b, 0, 0)   # changes only with batch tile -> loaded once per tile
    layer_map = lambda b, l: (l, 0, 0)   # changes with layer -> weights prefetched per layer

    in_specs = [
        pl.BlockSpec((Bt, S, F), batch_map),        # x (fresh input, used at layer 0)
        pl.BlockSpec((Bt, 1, S), batch_map),        # additive key-mask bias
        pl.BlockSpec((1, F, 3 * F), layer_map),     # fused Wqkv (bf16)
        pl.BlockSpec((1, 1, 3 * F), layer_map),     # fused bqkv
        pl.BlockSpec((1, F, F), layer_map),         # Wo (bf16)
        pl.BlockSpec((1, 1, F), layer_map),         # bo
        pl.BlockSpec((1, 1, F), layer_map),         # LN1 gamma
        pl.BlockSpec((1, 1, F), layer_map),         # LN1 beta
        pl.BlockSpec((1, F, hid), layer_map),       # W1 (bf16)
        pl.BlockSpec((1, 1, hid), layer_map),       # b1
        pl.BlockSpec((1, hid, F), layer_map),       # W2 (bf16)
        pl.BlockSpec((1, 1, F), layer_map),         # b2
        pl.BlockSpec((1, 1, F), layer_map),         # LN2 gamma
        pl.BlockSpec((1, 1, F), layer_map),         # LN2 beta
    ]

    kernel = functools.partial(bert_encoder_kernel, num_heads)
    return pl.pallas_call(
        kernel,
        out_shape=jax.ShapeDtypeStruct((B, S, F), x.dtype),
        grid=(nb, L),
        in_specs=in_specs,
        # Output block is resident across the layer axis -> layer-to-layer carry.
        out_specs=pl.BlockSpec((Bt, S, F), batch_map),
        scratch_shapes=[
            pltpu.VMEM((Bt, S, 3 * F), jnp.bfloat16),   # qkv staging (bf16)
            pltpu.VMEM((Bt, S, F), jnp.bfloat16),       # merged-context staging (bf16)
        ],
        compiler_params=pltpu.CompilerParams(
            dimension_semantics=("parallel", "arbitrary"),
            vmem_limit_bytes=_vmem_limit_bytes(),
        ),
    )(x, mask_bias, *packed)


def init_layer_params(key, feature, hidden):
    ks = jax.random.split(key, 6)
    std = 0.02

    def lin(k, i, o):
        return jax.random.normal(k, (i, o), jnp.float32) * std

    z = lambda n: jnp.zeros((1, n), jnp.float32)
    o = lambda n: jnp.ones((1, n), jnp.float32)
    return dict(
        wq=lin(ks[0], feature, feature), bq=z(feature),
        wk=lin(ks[1], feature, feature), bk=z(feature),
        wv=lin(ks[2], feature, feature), bv=z(feature),
        wo=lin(ks[3], feature, feature), bo=z(feature),
        g1=o(feature), be1=z(feature),
        w1=lin(ks[4], feature, hidden), b1=z(hidden),
        w2=lin(ks[5], hidden, feature), b2=z(feature),
        g2=o(feature), be2=z(feature),
    )


def _reference_encoder(x, mask, layer_params, num_heads):
    """Pure-JAX f32 reference of the same forward pass (for a sanity check)."""
    B, S, F = x.shape
    dh = F // num_heads
    if mask is None:
        mb = jnp.zeros((B, 1, 1, S), jnp.float32)
    else:
        mb = (mask.astype(jnp.float32) - 1.0)[:, None, None, :] * 1e9
    h = x
    for p in layer_params:
        q = h @ p['wq'] + p['bq']
        k = h @ p['wk'] + p['bk']
        v = h @ p['wv'] + p['bv']
        split = lambda t: t.reshape(B, S, num_heads, dh).transpose(0, 2, 1, 3)
        qh, kh, vh = split(q), split(k), split(v)
        s = jnp.einsum('bhqd,bhkd->bhqk', qh, kh) / (dh ** 0.5) + mb
        pa = jax.nn.softmax(s, axis=-1)
        ctx = jnp.einsum('bhqk,bhkd->bhqd', pa, vh).transpose(0, 2, 1, 3).reshape(B, S, F)
        attn = ctx @ p['wo'] + p['bo']
        h1 = _layernorm(h + attn, p['g1'], p['be1'])
        ff = _gelu(h1 @ p['w1'] + p['b1']) @ p['w2'] + p['b2']
        h = _layernorm(h1 + ff, p['g2'], p['be2'])
    return h


if __name__ == "__main__":
    # feature_size=32, hidden_size=64, attention_head_num=4, bert_layer_num=2
    B, S, F, HID, NHEADS, NLAYERS = 2, 8, 32, 64, 4, 2

    key = jax.random.PRNGKey(0)
    kx, kp = jax.random.split(key)
    x = jax.random.normal(kx, (B, S, F), jnp.float32)
    # attention mask: last 2 positions of every sequence are padding
    mask = jnp.ones((B, S), jnp.int32).at[:, -2:].set(0)

    layer_keys = jax.random.split(kp, NLAYERS)
    layer_params = [init_layer_params(k, F, HID) for k in layer_keys]

    out = bert_encoder(x, mask, layer_params, NHEADS)
    jax.block_until_ready(out)
    assert out.shape == (B, S, F) and out.dtype == jnp.float32

    # sanity check against an f32 pure-JAX reference (bf16 matmuls -> loose tol)
    ref = _reference_encoder(x, mask, layer_params, NHEADS)
    assert jnp.allclose(out, ref, atol=5e-2, rtol=5e-2), "mismatch vs reference"

    print("KERNEL_OK")
</pallas_src>

<mosaic_0001>
module attributes {stable_mosaic.version = 11 : i64} {
  func.func @bert_encoder_kernel(%arg0: i32, %arg1: i32, %arg2: memref<2x8x32xf32, #tpu.memory_space<vmem>>, %arg3: memref<2x1x8xf32, #tpu.memory_space<vmem>>, %arg4: memref<1x32x96xbf16, #tpu.memory_space<vmem>>, %arg5: memref<1x1x96xf32, #tpu.memory_space<vmem>>, %arg6: memref<1x32x32xbf16, #tpu.memory_space<vmem>>, %arg7: memref<1x1x32xf32, #tpu.memory_space<vmem>>, %arg8: memref<1x1x32xf32, #tpu.memory_space<vmem>>, %arg9: memref<1x1x32xf32, #tpu.memory_space<vmem>>, %arg10: memref<1x32x64xbf16, #tpu.memory_space<vmem>>, %arg11: memref<1x1x64xf32, #tpu.memory_space<vmem>>, %arg12: memref<1x64x32xbf16, #tpu.memory_space<vmem>>, %arg13: memref<1x1x32xf32, #tpu.memory_space<vmem>>, %arg14: memref<1x1x32xf32, #tpu.memory_space<vmem>>, %arg15: memref<1x1x32xf32, #tpu.memory_space<vmem>>, %arg16: memref<2x8x32xf32, #tpu.memory_space<vmem>>, %arg17: memref<2x8x96xbf16, #tpu.memory_space<vmem>>, %arg18: memref<2x8x32xbf16, #tpu.memory_space<vmem>>) attributes {dimension_semantics = [#tpu.dimension_semantics<parallel>, #tpu.dimension_semantics<arbitrary>], iteration_bounds = array<i64: 1, 2>, scalar_prefetch = 0 : i64, scratch_operands = 2 : i64, tpu.core_type = #tpu.core_type<tc>, window_params = [{transform_indices = @transform_0, window_bounds = array<i64: 2, 8, 32>}, {transform_indices = @transform_1, window_bounds = array<i64: 2, 1, 8>}, {transform_indices = @transform_2, window_bounds = array<i64: 1, 32, 96>}, {transform_indices = @transform_3, window_bounds = array<i64: 1, 1, 96>}, {transform_indices = @transform_4, window_bounds = array<i64: 1, 32, 32>}, {transform_indices = @transform_5, window_bounds = array<i64: 1, 1, 32>}, {transform_indices = @transform_6, window_bounds = array<i64: 1, 1, 32>}, {transform_indices = @transform_7, window_bounds = array<i64: 1, 1, 32>}, {transform_indices = @transform_8, window_bounds = array<i64: 1, 32, 64>}, {transform_indices = @transform_9, window_bounds = array<i64: 1, 1, 64>}, {transform_indices = @transform_10, window_bounds = array<i64: 1, 64, 32>}, {transform_indices = @transform_11, window_bounds = array<i64: 1, 1, 32>}, {transform_indices = @transform_12, window_bounds = array<i64: 1, 1, 32>}, {transform_indices = @transform_13, window_bounds = array<i64: 1, 1, 32>}, {transform_indices = @transform_14, window_bounds = array<i64: 2, 8, 32>}]} {
    %c0_i32 = arith.constant 0 : i32
    %0 = arith.cmpi eq, %arg1, %c0_i32 : i32
    %1 = arith.extui %0 : i1 to i32
    %c0_i32_0 = arith.constant 0 : i32
    %2 = arith.cmpi ne, %1, %c0_i32_0 : i32
    scf.if %2 {
      %c0_67 = arith.constant 0 : index
      %c0_68 = arith.constant 0 : index
      %c0_69 = arith.constant 0 : index
      %111 = vector.load %arg2[%c0_67, %c0_68, %c0_69] : memref<2x8x32xf32, #tpu.memory_space<vmem>>, vector<2x8x32xf32>
      %c0_70 = arith.constant 0 : index
      %c0_71 = arith.constant 0 : index
      %c0_72 = arith.constant 0 : index
      %112 = vector.load %arg16[%c0_70, %c0_71, %c0_72] : memref<2x8x32xf32, #tpu.memory_space<vmem>>, vector<2x8x32xf32>
      tpu.vector_store %arg16[%c0_70, %c0_71, %c0_72], %111 {strides = array<i32>} : memref<2x8x32xf32, #tpu.memory_space<vmem>>, vector<2x8x32xf32>,
    } else {
    }
    %c0 = arith.constant 0 : index
    %c0_1 = arith.constant 0 : index
    %c0_2 = arith.constant 0 : index
    %3 = vector.load %arg16[%c0, %c0_1, %c0_2] : memref<2x8x32xf32, #tpu.memory_space<vmem>>, vector<2x8x32xf32>
    %4 = vector.shape_cast %3 : vector<2x8x32xf32> to vector<16x32xf32>
    %5 = arith.truncf %4 : vector<16x32xf32> to vector<16x32xbf16>
    %c0_3 = arith.constant 0 : index
    %c0_4 = arith.constant 0 : index
    %c0_5 = arith.constant 0 : index
    %6 = vector.load %arg4[%c0_3, %c0_4, %c0_5] : memref<1x32x96xbf16, #tpu.memory_space<vmem>>, vector<1x32x96xbf16>
    %7 = vector.shape_cast %6 : vector<1x32x96xbf16> to vector<32x96xbf16>
    %cst = arith.constant dense<0.000000e+00> : vector<16x96xf32>
    %8 = tpu.matmul %5, %7, %cst {dimension_numbers = #tpu.dot_dimension_numbers<[1], [0], [0], [1], [0, 0, 1, 1], [], []>} : vector<16x32xbf16>, vector<32x96xbf16>, vector<16x96xf32> -> vector<16x96xf32>
    %c0_6 = arith.constant 0 : index
    %c0_7 = arith.constant 0 : index
    %c0_8 = arith.constant 0 : index
    %9 = vector.load %arg5[%c0_6, %c0_7, %c0_8] : memref<1x1x96xf32, #tpu.memory_space<vmem>>, vector<1x1x96xf32>
    %10 = vector.shape_cast %9 : vector<1x1x96xf32> to vector<1x96xf32>
    %11 = vector.broadcast %10 : vector<1x96xf32> to vector<16x96xf32>
    %12 = arith.addf %8, %11 : vector<16x96xf32>
    %13 = arith.truncf %12 : vector<16x96xf32> to vector<16x96xbf16>
    %14 = vector.shape_cast %13 : vector<16x96xbf16> to vector<2x8x96xbf16>
    %c0_9 = arith.constant 0 : index
    %c0_10 = arith.constant 0 : index
    %c0_11 = arith.constant 0 : index
    %15 = vector.load %arg17[%c0_9, %c0_10, %c0_11] : memref<2x8x96xbf16, #tpu.memory_space<vmem>>, vector<2x8x96xbf16>
    tpu.vector_store %arg17[%c0_9, %c0_10, %c0_11], %14 {strides = array<i32>} : memref<2x8x96xbf16, #tpu.memory_space<vmem>>, vector<2x8x96xbf16>,
    %c0_i32_12 = arith.constant 0 : i32
    %c2_i32 = arith.constant 2 : i32
    %16 = arith.addi %c0_i32_12, %c2_i32 : i32
    %c1_i32 = arith.constant 1 : i32
    scf.for %arg19 = %c0_i32_12 to %16 step %c1_i32  : i32 {
      %111 = arith.index_cast %arg19 : i32 to index
      %c0_67 = arith.constant 0 : index
      %c0_68 = arith.constant 0 : index
      %112 = vector.load %arg17[%111, %c0_67, %c0_68] : memref<2x8x96xbf16, #tpu.memory_space<vmem>>, vector<1x8x96xbf16>
      %113 = vector.shape_cast %112 : vector<1x8x96xbf16> to vector<8x96xbf16>
      %114 = tpu.transpose %113, [1, 0] : vector<8x96xbf16> -> vector<96x8xbf16>
      %115 = vector.shape_cast %114 : vector<96x8xbf16> to vector<3x4x8x8xbf16>
      %116 = vector.extract_strided_slice %115 {offsets = [0, 0, 0, 0], sizes = [1, 4, 8, 8], strides = [1, 1, 1, 1]} : vector<3x4x8x8xbf16> to vector<1x4x8x8xbf16>
      %117 = vector.shape_cast %116 : vector<1x4x8x8xbf16> to vector<4x8x8xbf16>
      %118 = tpu.transpose %117, [0, 2, 1] : vector<4x8x8xbf16> -> vector<4x8x8xbf16>
      %119 = vector.extract_strided_slice %115 {offsets = [1, 0, 0, 0], sizes = [1, 4, 8, 8], strides = [1, 1, 1, 1]} : vector<3x4x8x8xbf16> to vector<1x4x8x8xbf16>
      %120 = vector.shape_cast %119 : vector<1x4x8x8xbf16> to vector<4x8x8xbf16>
      %121 = vector.extract_strided_slice %115 {offsets = [2, 0, 0, 0], sizes = [1, 4, 8, 8], strides = [1, 1, 1, 1]} : vector<3x4x8x8xbf16> to vector<1x4x8x8xbf16>
      %122 = vector.shape_cast %121 : vector<1x4x8x8xbf16> to vector<4x8x8xbf16>
      "tpu.trace_start"() <{level = 10 : i32, message = "hqd,hdk->hqk"}> : () -> ()
      %cst_69 = arith.constant dense<0.000000e+00> : vector<4x8x8xf32>
      %123 = tpu.matmul %118, %120, %cst_69 {dimension_numbers = #tpu.dot_dimension_numbers<[2], [1], [1], [2], [0, 0, 0, 1, 1, 2], [0], [0]>} : vector<4x8x8xbf16>, vector<4x8x8xbf16>, vector<4x8x8xf32> -> vector<4x8x8xf32>
      "tpu.trace_stop"() : () -> ()
      %124 = arith.index_cast %arg19 : i32 to index
      %c0_70 = arith.constant 0 : index
      %c0_71 = arith.constant 0 : index
      %125 = vector.load %arg3[%124, %c0_70, %c0_71] : memref<2x1x8xf32, #tpu.memory_space<vmem>>, vector<1x1x8xf32>
      %126 = vector.shape_cast %125 : vector<1x1x8xf32> to vector<1x8xf32>
      %127 = vector.shape_cast %126 : vector<1x8xf32> to vector<1x1x8xf32>
      %128 = vector.broadcast %127 : vector<1x1x8xf32> to vector<4x8x8xf32>
      %129 = arith.addf %123, %128 : vector<4x8x8xf32>
      %cst_72 = arith.constant dense<0xFF800000> : vector<4x8xf32>
      %130 = vector.multi_reduction <maximumf>, %129, %cst_72 [2] : vector<4x8x8xf32> to vector<4x8xf32>
      %131 = vector.shape_cast %130 : vector<4x8xf32> to vector<4x8x1xf32>
      %132 = vector.broadcast %131 : vector<4x8x1xf32> to vector<4x8x8xf32>
      %133 = arith.subf %129, %132 : vector<4x8x8xf32>
      %134 = math.exp %133 : vector<4x8x8xf32>
      %cst_73 = arith.constant dense<0.000000e+00> : vector<4x8xf32>
      %135 = vector.multi_reduction <add>, %134, %cst_73 [2] : vector<4x8x8xf32> to vector<4x8xf32>
      %136 = vector.shape_cast %135 : vector<4x8xf32> to vector<4x8x1xf32>
      %137 = tpu.reciprocal %136 {approx = true} : vector<4x8x1xf32> -> vector<4x8x1xf32>
      %138 = vector.broadcast %137 : vector<4x8x1xf32> to vector<4x8x8xf32>
      %139 = arith.mulf %134, %138 : vector<4x8x8xf32>
      %140 = arith.truncf %139 : vector<4x8x8xf32> to vector<4x8x8xbf16>
      "tpu.trace_start"() <{level = 10 : i32, message = "hdk,hqk->hdq"}> : () -> ()
      %cst_74 = arith.constant dense<0.000000e+00> : vector<4x8x8xf32>
      %141 = tpu.matmul %122, %140, %cst_74 {dimension_numbers = #tpu.dot_dimension_numbers<[2], [2], [1], [1], [0, 0, 0, 1, 1, 1], [0], [0]>} : vector<4x8x8xbf16>, vector<4x8x8xbf16>, vector<4x8x8xf32> -> vector<4x8x8xf32>
      "tpu.trace_stop"() : () -> ()
      %142 = arith.truncf %141 : vector<4x8x8xf32> to vector<4x8x8xbf16>
      %143 = vector.shape_cast %142 : vector<4x8x8xbf16> to vector<32x8xbf16>
      %144 = tpu.transpose %143, [1, 0] : vector<32x8xbf16> -> vector<8x32xbf16>
      %145 = arith.index_cast %arg19 : i32 to index
      %c0_75 = arith.constant 0 : index
      %c0_76 = arith.constant 0 : index
      %146 = vector.load %arg18[%145, %c0_75, %c0_76] : memref<2x8x32xbf16, #tpu.memory_space<vmem>>, vector<1x8x32xbf16>
      %147 = vector.shape_cast %146 : vector<1x8x32xbf16> to vector<8x32xbf16>
      %148 = vector.shape_cast %144 : vector<8x32xbf16> to vector<1x8x32xbf16>
      tpu.vector_store %arg18[%145, %c0_75, %c0_76], %148 {strides = array<i32>} : memref<2x8x32xbf16, #tpu.memory_space<vmem>>, vector<1x8x32xbf16>,
    }
    %c2_i32_13 = arith.constant 2 : i32
    %c0_14 = arith.constant 0 : index
    %c0_15 = arith.constant 0 : index
    %c0_16 = arith.constant 0 : index
    %17 = vector.load %arg18[%c0_14, %c0_15, %c0_16] : memref<2x8x32xbf16, #tpu.memory_space<vmem>>, vector<2x8x32xbf16>
    %18 = vector.shape_cast %17 : vector<2x8x32xbf16> to vector<16x32xbf16>
    %c0_17 = arith.constant 0 : index
    %c0_18 = arith.constant 0 : index
    %c0_19 = arith.constant 0 : index
    %19 = vector.load %arg6[%c0_17, %c0_18, %c0_19] : memref<1x32x32xbf16, #tpu.memory_space<vmem>>, vector<1x32x32xbf16>
    %20 = vector.shape_cast %19 : vector<1x32x32xbf16> to vector<32x32xbf16>
    %cst_20 = arith.constant dense<0.000000e+00> : vector<16x32xf32>
    %21 = tpu.matmul %18, %20, %cst_20 {dimension_numbers = #tpu.dot_dimension_numbers<[1], [0], [0], [1], [0, 0, 1, 1], [], []>} : vector<16x32xbf16>, vector<32x32xbf16>, vector<16x32xf32> -> vector<16x32xf32>
    %c0_21 = arith.constant 0 : index
    %c0_22 = arith.constant 0 : index
    %c0_23 = arith.constant 0 : index
    %22 = vector.load %arg7[%c0_21, %c0_22, %c0_23] : memref<1x1x32xf32, #tpu.memory_space<vmem>>, vector<1x1x32xf32>
    %23 = vector.shape_cast %22 : vector<1x1x32xf32> to vector<1x32xf32>
    %24 = vector.broadcast %23 : vector<1x32xf32> to vector<16x32xf32>
    %25 = arith.addf %21, %24 : vector<16x32xf32>
    %26 = arith.addf %4, %25 : vector<16x32xf32>
    %c0_24 = arith.constant 0 : index
    %c0_25 = arith.constant 0 : index
    %c0_26 = arith.constant 0 : index
    %27 = vector.load %arg8[%c0_24, %c0_25, %c0_26] : memref<1x1x32xf32, #tpu.memory_space<vmem>>, vector<1x1x32xf32>
    %28 = vector.shape_cast %27 : vector<1x1x32xf32> to vector<1x32xf32>
    %c0_27 = arith.constant 0 : index
    %c0_28 = arith.constant 0 : index
    %c0_29 = arith.constant 0 : index
    %29 = vector.load %arg9[%c0_27, %c0_28, %c0_29] : memref<1x1x32xf32, #tpu.memory_space<vmem>>, vector<1x1x32xf32>
    %30 = vector.shape_cast %29 : vector<1x1x32xf32> to vector<1x32xf32>
    %cst_30 = arith.constant dense<0.000000e+00> : vector<16xf32>
    %31 = vector.multi_reduction <add>, %26, %cst_30 [1] : vector<16x32xf32> to vector<16xf32>
    %32 = vector.shape_cast %31 : vector<16xf32> to vector<16x1xf32>
    %cst_31 = arith.constant 3.200000e+01 : f32
    %33 = vector.broadcast %cst_31 : f32 to vector<16x1xf32>
    %34 = arith.divf %32, %33 : vector<16x1xf32>
    %35 = vector.broadcast %34 : vector<16x1xf32> to vector<16x32xf32>
    %36 = arith.subf %26, %35 : vector<16x32xf32>
    %37 = arith.mulf %36, %36 : vector<16x32xf32>
    %cst_32 = arith.constant dense<0.000000e+00> : vector<16xf32>
    %38 = vector.multi_reduction <add>, %37, %cst_32 [1] : vector<16x32xf32> to vector<16xf32>
    %39 = vector.shape_cast %38 : vector<16xf32> to vector<16x1xf32>
    %cst_33 = arith.constant 3.200000e+01 : f32
    %40 = vector.broadcast %cst_33 : f32 to vector<16x1xf32>
    %41 = arith.divf %39, %40 : vector<16x1xf32>
    %42 = vector.broadcast %34 : vector<16x1xf32> to vector<16x32xf32>
    %43 = arith.subf %26, %42 : vector<16x32xf32>
    %cst_34 = arith.constant 9.99999996E-13 : f32
    %44 = vector.broadcast %cst_34 : f32 to vector<16x1xf32>
    %45 = arith.addf %41, %44 : vector<16x1xf32>
    %46 = math.rsqrt %45 : vector<16x1xf32>
    %47 = vector.broadcast %46 : vector<16x1xf32> to vector<16x32xf32>
    %48 = arith.mulf %43, %47 : vector<16x32xf32>
    %49 = vector.broadcast %28 : vector<1x32xf32> to vector<16x32xf32>
    %50 = arith.mulf %48, %49 : vector<16x32xf32>
    %51 = vector.broadcast %30 : vector<1x32xf32> to vector<16x32xf32>
    %52 = arith.addf %50, %51 : vector<16x32xf32>
    %53 = arith.truncf %52 : vector<16x32xf32> to vector<16x32xbf16>
    %c0_35 = arith.constant 0 : index
    %c0_36 = arith.constant 0 : index
    %c0_37 = arith.constant 0 : index
    %54 = vector.load %arg10[%c0_35, %c0_36, %c0_37] : memref<1x32x64xbf16, #tpu.memory_space<vmem>>, vector<1x32x64xbf16>
    %55 = vector.shape_cast %54 : vector<1x32x64xbf16> to vector<32x64xbf16>
    %cst_38 = arith.constant dense<0.000000e+00> : vector<16x64xf32>
    %56 = tpu.matmul %53, %55, %cst_38 {dimension_numbers = #tpu.dot_dimension_numbers<[1], [0], [0], [1], [0, 0, 1, 1], [], []>} : vector<16x32xbf16>, vector<32x64xbf16>, vector<16x64xf32> -> vector<16x64xf32>
    %c0_39 = arith.constant 0 : index
    %c0_40 = arith.constant 0 : index
    %c0_41 = arith.constant 0 : index
    %57 = vector.load %arg11[%c0_39, %c0_40, %c0_41] : memref<1x1x64xf32, #tpu.memory_space<vmem>>, vector<1x1x64xf32>
    %58 = vector.shape_cast %57 : vector<1x1x64xf32> to vector<1x64xf32>
    %59 = vector.broadcast %58 : vector<1x64xf32> to vector<16x64xf32>
    %60 = arith.addf %56, %59 : vector<16x64xf32>
    %cst_42 = arith.constant 5.000000e-01 : f32
    %61 = vector.broadcast %cst_42 : f32 to vector<16x64xf32>
    %62 = arith.mulf %61, %60 : vector<16x64xf32>
    %cst_43 = arith.constant 4.471500e-02 : f32
    %63 = vector.broadcast %cst_43 : f32 to vector<16x64xf32>
    %64 = arith.mulf %63, %60 : vector<16x64xf32>
    %65 = arith.mulf %64, %60 : vector<16x64xf32>
    %66 = arith.mulf %65, %60 : vector<16x64xf32>
    %67 = arith.addf %60, %66 : vector<16x64xf32>
    %cst_44 = arith.constant 0.797884583 : f32
    %68 = vector.broadcast %cst_44 : f32 to vector<16x64xf32>
    %69 = arith.mulf %68, %67 : vector<16x64xf32>
    %70 = math.tanh %69 : vector<16x64xf32>
    %cst_45 = arith.constant 1.000000e+00 : f32
    %71 = vector.broadcast %cst_45 : f32 to vector<16x64xf32>
    %72 = arith.addf %71, %70 : vector<16x64xf32>
    %73 = arith.mulf %62, %72 : vector<16x64xf32>
    %74 = arith.truncf %73 : vector<16x64xf32> to vector<16x64xbf16>
    %c0_46 = arith.constant 0 : index
    %c0_47 = arith.constant 0 : index
    %c0_48 = arith.constant 0 : index
    %75 = vector.load %arg12[%c0_46, %c0_47, %c0_48] : memref<1x64x32xbf16, #tpu.memory_space<vmem>>, vector<1x64x32xbf16>
    %76 = vector.shape_cast %75 : vector<1x64x32xbf16> to vector<64x32xbf16>
    %cst_49 = arith.constant dense<0.000000e+00> : vector<16x32xf32>
    %77 = tpu.matmul %74, %76, %cst_49 {dimension_numbers = #tpu.dot_dimension_numbers<[1], [0], [0], [1], [0, 0, 1, 1], [], []>} : vector<16x64xbf16>, vector<64x32xbf16>, vector<16x32xf32> -> vector<16x32xf32>
    %c0_50 = arith.constant 0 : index
    %c0_51 = arith.constant 0 : index
    %c0_52 = arith.constant 0 : index
    %78 = vector.load %arg13[%c0_50, %c0_51, %c0_52] : memref<1x1x32xf32, #tpu.memory_space<vmem>>, vector<1x1x32xf32>
    %79 = vector.shape_cast %78 : vector<1x1x32xf32> to vector<1x32xf32>
    %80 = vector.broadcast %79 : vector<1x32xf32> to vector<16x32xf32>
    %81 = arith.addf %77, %80 : vector<16x32xf32>
    %82 = arith.addf %52, %81 : vector<16x32xf32>
    %c0_53 = arith.constant 0 : index
    %c0_54 = arith.constant 0 : index
    %c0_55 = arith.constant 0 : index
    %83 = vector.load %arg14[%c0_53, %c0_54, %c0_55] : memref<1x1x32xf32, #tpu.memory_space<vmem>>, vector<1x1x32xf32>
    %84 = vector.shape_cast %83 : vector<1x1x32xf32> to vector<1x32xf32>
    %c0_56 = arith.constant 0 : index
    %c0_57 = arith.constant 0 : index
    %c0_58 = arith.constant 0 : index
    %85 = vector.load %arg15[%c0_56, %c0_57, %c0_58] : memref<1x1x32xf32, #tpu.memory_space<vmem>>, vector<1x1x32xf32>
    %86 = vector.shape_cast %85 : vector<1x1x32xf32> to vector<1x32xf32>
    %cst_59 = arith.constant dense<0.000000e+00> : vector<16xf32>
    %87 = vector.multi_reduction <add>, %82, %cst_59 [1] : vector<16x32xf32> to vector<16xf32>
    %88 = vector.shape_cast %87 : vector<16xf32> to vector<16x1xf32>
    %cst_60 = arith.constant 3.200000e+01 : f32
    %89 = vector.broadcast %cst_60 : f32 to vector<16x1xf32>
    %90 = arith.divf %88, %89 : vector<16x1xf32>
    %91 = vector.broadcast %90 : vector<16x1xf32> to vector<16x32xf32>
    %92 = arith.subf %82, %91 : vector<16x32xf32>
    %93 = arith.mulf %92, %92 : vector<16x32xf32>
    %cst_61 = arith.constant dense<0.000000e+00> : vector<16xf32>
    %94 = vector.multi_reduction <add>, %93, %cst_61 [1] : vector<16x32xf32> to vector<16xf32>
    %95 = vector.shape_cast %94 : vector<16xf32> to vector<16x1xf32>
    %cst_62 = arith.constant 3.200000e+01 : f32
    %96 = vector.broadcast %cst_62 : f32 to vector<16x1xf32>
    %97 = arith.divf %95, %96 : vector<16x1xf32>
    %98 = vector.broadcast %90 : vector<16x1xf32> to vector<16x32xf32>
    %99 = arith.subf %82, %98 : vector<16x32xf32>
    %cst_63 = arith.constant 9.99999996E-13 : f32
    %100 = vector.broadcast %cst_63 : f32 to vector<16x1xf32>
    %101 = arith.addf %97, %100 : vector<16x1xf32>
    %102 = math.rsqrt %101 : vector<16x1xf32>
    %103 = vector.broadcast %102 : vector<16x1xf32> to vector<16x32xf32>
    %104 = arith.mulf %99, %103 : vector<16x32xf32>
    %105 = vector.broadcast %84 : vector<1x32xf32> to vector<16x32xf32>
    %106 = arith.mulf %104, %105 : vector<16x32xf32>
    %107 = vector.broadcast %86 : vector<1x32xf32> to vector<16x32xf32>
    %108 = arith.addf %106, %107 : vector<16x32xf32>
    %109 = vector.shape_cast %108 : vector<16x32xf32> to vector<2x8x32xf32>
    %c0_64 = arith.constant 0 : index
    %c0_65 = arith.constant 0 : index
    %c0_66 = arith.constant 0 : index
    %110 = vector.load %arg16[%c0_64, %c0_65, %c0_66] : memref<2x8x32xf32, #tpu.memory_space<vmem>>, vector<2x8x32xf32>
    tpu.vector_store %arg16[%c0_64, %c0_65, %c0_66], %109 {strides = array<i32>} : memref<2x8x32xf32, #tpu.memory_space<vmem>>, vector<2x8x32xf32>,
    return
  }
  func.func @transform_0(%arg0: i32, %arg1: i32) -> (i32, i32, i32) {
    %c0_i32 = arith.constant 0 : i32
    %c0_i32_0 = arith.constant 0 : i32
    %c0_i32_1 = arith.constant 0 : i32
    return %arg0, %c0_i32, %c0_i32_0 : i32, i32, i32
  }
  func.func @transform_1(%arg0: i32, %arg1: i32) -> (i32, i32, i32) {
    %c0_i32 = arith.constant 0 : i32
    %c0_i32_0 = arith.constant 0 : i32
    %c0_i32_1 = arith.constant 0 : i32
    return %arg0, %c0_i32, %c0_i32_0 : i32, i32, i32
  }
  func.func @transform_2(%arg0: i32, %arg1: i32) -> (i32, i32, i32) {
    %c0_i32 = arith.constant 0 : i32
    %c0_i32_0 = arith.constant 0 : i32
    %c0_i32_1 = arith.constant 0 : i32
    return %arg1, %c0_i32, %c0_i32_0 : i32, i32, i32
  }
  func.func @transform_3(%arg0: i32, %arg1: i32) -> (i32, i32, i32) {
    %c0_i32 = arith.constant 0 : i32
    %c0_i32_0 = arith.constant 0 : i32
    %c0_i32_1 = arith.constant 0 : i32
    return %arg1, %c0_i32, %c0_i32_0 : i32, i32, i32
  }
  func.func @transform_4(%arg0: i32, %arg1: i32) -> (i32, i32, i32) {
    %c0_i32 = arith.constant 0 : i32
    %c0_i32_0 = arith.constant 0 : i32
    %c0_i32_1 = arith.constant 0 : i32
    return %arg1, %c0_i32, %c0_i32_0 : i32, i32, i32
  }
  func.func @transform_5(%arg0: i32, %arg1: i32) -> (i32, i32, i32) {
    %c0_i32 = arith.constant 0 : i32
    %c0_i32_0 = arith.constant 0 : i32
    %c0_i32_1 = arith.constant 0 : i32
    return %arg1, %c0_i32, %c0_i32_0 : i32, i32, i32
  }
  func.func @transform_6(%arg0: i32, %arg1: i32) -> (i32, i32, i32) {
    %c0_i32 = arith.constant 0 : i32
    %c0_i32_0 = arith.constant 0 : i32
    %c0_i32_1 = arith.constant 0 : i32
    return %arg1, %c0_i32, %c0_i32_0 : i32, i32, i32
  }
  func.func @transform_7(%arg0: i32, %arg1: i32) -> (i32, i32, i32) {
    %c0_i32 = arith.constant 0 : i32
    %c0_i32_0 = arith.constant 0 : i32
    %c0_i32_1 = arith.constant 0 : i32
    return %arg1, %c0_i32, %c0_i32_0 : i32, i32, i32
  }
  func.func @transform_8(%arg0: i32, %arg1: i32) -> (i32, i32, i32) {
    %c0_i32 = arith.constant 0 : i32
    %c0_i32_0 = arith.constant 0 : i32
    %c0_i32_1 = arith.constant 0 : i32
    return %arg1, %c0_i32, %c0_i32_0 : i32, i32, i32
  }
  func.func @transform_9(%arg0: i32, %arg1: i32) -> (i32, i32, i32) {
    %c0_i32 = arith.constant 0 : i32
    %c0_i32_0 = arith.constant 0 : i32
    %c0_i32_1 = arith.constant 0 : i32
    return %arg1, %c0_i32, %c0_i32_0 : i32, i32, i32
  }
  func.func @transform_10(%arg0: i32, %arg1: i32) -> (i32, i32, i32) {
    %c0_i32 = arith.constant 0 : i32
    %c0_i32_0 = arith.constant 0 : i32
    %c0_i32_1 = arith.constant 0 : i32
    return %arg1, %c0_i32, %c0_i32_0 : i32, i32, i32
  }
  func.func @transform_11(%arg0: i32, %arg1: i32) -> (i32, i32, i32) {
    %c0_i32 = arith.constant 0 : i32
    %c0_i32_0 = arith.constant 0 : i32
    %c0_i32_1 = arith.constant 0 : i32
    return %arg1, %c0_i32, %c0_i32_0 : i32, i32, i32
  }
  func.func @transform_12(%arg0: i32, %arg1: i32) -> (i32, i32, i32) {
    %c0_i32 = arith.constant 0 : i32
    %c0_i32_0 = arith.constant 0 : i32
    %c0_i32_1 = arith.constant 0 : i32
    return %arg1, %c0_i32, %c0_i32_0 : i32, i32, i32
  }
  func.func @transform_13(%arg0: i32, %arg1: i32) -> (i32, i32, i32) {
    %c0_i32 = arith.constant 0 : i32
    %c0_i32_0 = arith.constant 0 : i32
    %c0_i32_1 = arith.constant 0 : i32
    return %arg1, %c0_i32, %c0_i32_0 : i32, i32, i32
  }
  func.func @transform_14(%arg0: i32, %arg1: i32) -> (i32, i32, i32) {
    %c0_i32 = arith.constant 0 : i32
    %c0_i32_0 = arith.constant 0 : i32
    %c0_i32_1 = arith.constant 0 : i32
    return %arg0, %c0_i32, %c0_i32_0 : i32, i32, i32
  }
}

</mosaic_0001>

<llo_original>
// kernel: tpu_custom_call.1
$region0: #{tpu_custom_call.1}
  #allocation0 [shape = 'u32[]', space=smem, size = 0x4, offset = 0x4, fixed_abs, tag = 'smem constant byte address 0x4 - core index']
  #allocation1 [shape = 'u32[144,128]{1,0:T(1,128)}', space=vmem, size = 0x12000, scoped, tag = 'internal scratch']
  #allocation2 [shape = 'bf16[2,8,96]{2,1,0:T(8,128)(2,1)}', space=vmem, size = 0x1000, scoped, tag = 'scratch operand']
  #allocation3 [shape = 'bf16[2,8,32]{2,1,0:T(8,128)(2,1)}', space=vmem, size = 0x1000, scoped, tag = 'scratch operand']
  %s0 = inlined_call_operand.hbm [shape: f32[2,8,32], index: 0, kind: input, shape index: {}]
  %s1 = inlined_call_operand.hbm [shape: f32[2,1,8], index: 1, kind: input, shape index: {}]
  %s2 = inlined_call_operand.vmem [shape: bf16[2,32,96], index: 2, kind: input, shape index: {}]
  %s3 = inlined_call_operand.vmem [shape: f32[2,1,96], index: 3, kind: input, shape index: {}]
  %s4 = inlined_call_operand.vmem [shape: bf16[2,32,32], index: 4, kind: input, shape index: {}]
  %s5 = inlined_call_operand.vmem [shape: f32[2,1,32], index: 5, kind: input, shape index: {}]
  %s6 = inlined_call_operand.vmem [shape: f32[2,1,32], index: 6, kind: input, shape index: {}]
  %s7 = inlined_call_operand.vmem [shape: f32[2,1,32], index: 7, kind: input, shape index: {}]
  %s8 = inlined_call_operand.vmem [shape: bf16[2,32,64], index: 8, kind: input, shape index: {}]
  %s9 = inlined_call_operand.vmem [shape: f32[2,1,64], index: 9, kind: input, shape index: {}]
  %s10 = inlined_call_operand.vmem [shape: bf16[2,64,32], index: 10, kind: input, shape index: {}]
  %s11 = inlined_call_operand.vmem [shape: f32[2,1,32], index: 11, kind: input, shape index: {}]
  %s12 = inlined_call_operand.vmem [shape: f32[2,1,32], index: 12, kind: input, shape index: {}]
  %s13 = inlined_call_operand.vmem [shape: f32[2,1,32], index: 13, kind: input, shape index: {}]
  %s14 = inlined_call_operand.hbm [shape: f32[2,8,32], index: 14, kind: output, shape index: {}]
  %s15 = sld [smem:[#allocation0]]
  $region108: #{tpu_custom_call.1} parent=0
    _
  %s17 = ssub.s32 1, %s15
  %s18 = scalar_select 0, %s17, %s15
  $region1: #{tpu_custom_call.1} parent=0
    #allocation4 [shape = 'u8[8192]{0}', space=vmem, size = 0x2000, scoped, tag = 'input window, operand 0, single buffered']
    #allocation5 [shape = 's32[2]{0}', space=sflag, size = 0x8, scoped, tag = 'scoped memory for tpu_custom_call.1']
    #allocation6 [shape = 's32[2]{0}', space=sflag, size = 0x8, scoped, tag = 'scoped memory for tpu_custom_call.1']
    #allocation7 [shape = 'u8[1024]{0}', space=vmem, size = 0x400, scoped, tag = 'input window, operand 1, single buffered']
    #allocation8 [shape = 's32[1]{0}', space=sflag, size = 0x4, scoped, tag = 'scoped memory for tpu_custom_call.1']
    #allocation9 [shape = 'u8[8192]{0}', space=vmem, size = 0x2000, scoped, tag = 'output window, operand 0, single buffered']
    %19 = vsyncpa [#allocation5], 0
    %20 = vsyncpa [#allocation8], 0
    %21 = vsyncpa [#allocation6], 0
    loop: start=0, step=1, limit=4
    $region2: #{tpu_custom_call.1} parent=1 // loop_pre_header
      _
    $region3: #{tpu_custom_call.1} parent=1 // loop_header
      %s23 = sphi 0, %s27
      %p24 = scmp.ge.s32.totalorder %s23, 4
      %s30 = sphi 0, %s42
      %s31 = sphi 0, %s38
      %s32 = sphi 0, %s30
      %s33 = sphi 0, %s31
      %s34 = sphi 0, %s32
      %s35 = sphi 0, %s33
      %s45 = sphi 0, %s47
      %s48 = sphi 0, %s45
      %s49 = sphi 0, %s48
      %s65 = sphi 0, %s49
      %s71 = sphi 0, %s73
      %s74 = sphi 0, %s71
      %s75 = sphi 0, %s74
      %s91 = sphi 0, %s75
      %s97 = sphi 0, %s99
      %s100 = sphi 0, %s97
      %s101 = sphi 0, %s100
      %s117 = sphi 0, %s101
      %s123 = sphi 0, %s125
      %s126 = sphi 0, %s123
      %s127 = sphi 0, %s126
      %s143 = sphi 0, %s127
      %s149 = sphi 0, %s151
      %s152 = sphi 0, %s149
      %s153 = sphi 0, %s152
      %s169 = sphi 0, %s153
      %s175 = sphi 0, %s177
      %s178 = sphi 0, %s175
      %s179 = sphi 0, %s178
      %s195 = sphi 0, %s179
      %s201 = sphi 0, %s203
      %s204 = sphi 0, %s201
      %s205 = sphi 0, %s204
      %s221 = sphi 0, %s205
      %s227 = sphi 0, %s229
      %s230 = sphi 0, %s227
      %s231 = sphi 0, %s230
      %s247 = sphi 0, %s231
      %s253 = sphi 0, %s255
      %s256 = sphi 0, %s253
      %s257 = sphi 0, %s256
      %s273 = sphi 0, %s257
      %s279 = sphi 0, %s281
      %s282 = sphi 0, %s279
      %s283 = sphi 0, %s282
      %s299 = sphi 0, %s283
      %s305 = sphi 0, %s307
      %s308 = sphi 0, %s305
      %s309 = sphi 0, %s308
      %s325 = sphi 0, %s309
      %s331 = sphi 0, %s333
      %s334 = sphi 0, %s331
      %s335 = sphi 0, %s334
      %s351 = sphi 0, %s335
      %s357 = sphi 0, %s359
      %s360 = sphi 0, %s357
      %s361 = sphi 0, %s360
      %s377 = sphi 0, %s361
      %s383 = sphi 0, %s385
      %s386 = sphi 0, %s383
      %s387 = sphi 0, %s386
      %s403 = sphi 0, %s387
      %s409 = sphi 0, %s411
      %s412 = sphi 0, %s409
      %s413 = sphi 0, %s412
      %s429 = sphi 0, %s413
    $region4: #{tpu_custom_call.1} parent=1 // loop_header_branch
      %26 = sbr.rel (%p24) target = $region8
    $region5: #{tpu_custom_call.1} parent=1 // loop_body
      %s28 = ssub.s32 %s23, 1
      %s29 = ssub.s32 %s23, 2
      %s36 = sadd.s32 1, %s31
      %p37 = scmp.ge.s32.totalorder %s36, 2
      %s38 = scalar_select %p37, 0, %s36
      %s39 = sadd.s32 1, %s30
      %s40 = scalar_select %p37, %s39, %s30
      %p41 = scmp.ge.s32.totalorder %s40, 1
      %s42 = scalar_select %p41, 0, %s40
      %s43 = ssub.s32 %s30, %s42
      %p44 = scmp.eq.s32.totalorder %s43, 0
      %s46 = sadd.s32 %s45, 1
      %s47 = scalar_select %p44, %s45, %s46
      %p50 = pneg %p44
      %p51 = scmp.eq.s32.totalorder %s23, 1
      %p52 = por %p50, %p51
      %p53 = scmp.ne.s32.totalorder %s45, %s48
      %p54 = scmp.eq.s32.totalorder %s23, 0
      %p55 = por %p53, %p54
      %p56 = scmp.ne.s32.totalorder %s45, %s48
      %p57 = scmp.eq.s32.totalorder %s28, 1
      %p58 = por %p56, %p57
      %p59 = scmp.ne.s32.totalorder %s48, %s49
      %p60 = scmp.eq.s32.totalorder %s28, 0
      %p61 = por %p59, %p60
      %p62 = scmp.ne.s32.totalorder %s48, %s49
      %p63 = scmp.eq.s32.totalorder %s29, 1
      %p64 = por %p62, %p63
      %p66 = scmp.ne.s32.totalorder %s49, %s65
      %p67 = scmp.eq.s32.totalorder %s29, 0
      %p68 = por %p66, %p67
      %s69 = ssub.s32 %s30, %s42
      %p70 = scmp.eq.s32.totalorder %s69, 0
      %s72 = sadd.s32 %s71, 1
      %s73 = scalar_select %p70, %s71, %s72
      %p76 = pneg %p70
      %p77 = scmp.eq.s32.totalorder %s23, 1
      %p78 = por %p76, %p77
      %p79 = scmp.ne.s32.totalorder %s71, %s74
      %p80 = scmp.eq.s32.totalorder %s23, 0
      %p81 = por %p79, %p80
      %p82 = scmp.ne.s32.totalorder %s71, %s74
      %p83 = scmp.eq.s32.totalorder %s28, 1
      %p84 = por %p82, %p83
      %p85 = scmp.ne.s32.totalorder %s74, %s75
      %p86 = scmp.eq.s32.totalorder %s28, 0
      %p87 = por %p85, %p86
      %p88 = scmp.ne.s32.totalorder %s74, %s75
      %p89 = scmp.eq.s32.totalorder %s29, 1
      %p90 = por %p88, %p89
      %p92 = scmp.ne.s32.totalorder %s75, %s91
      %p93 = scmp.eq.s32.totalorder %s29, 0
      %p94 = por %p92, %p93
      %s95 = ssub.s32 %s31, %s38
      %p96 = scmp.eq.s32.totalorder %s95, 0
      %s98 = sadd.s32 %s97, 1
      %s99 = scalar_select %p96, %s97, %s98
      %p102 = pneg %p96
      %p103 = scmp.eq.s32.totalorder %s23, 1
      %p104 = por %p102, %p103
      %p105 = scmp.ne.s32.totalorder %s97, %s100
      %p106 = scmp.eq.s32.totalorder %s23, 0
      %p107 = por %p105, %p106
      %p108 = scmp.ne.s32.totalorder %s97, %s100
      %p109 = scmp.eq.s32.totalorder %s28, 1
      %p110 = por %p108, %p109
      %p111 = scmp.ne.s32.totalorder %s100, %s101
      %p112 = scmp.eq.s32.totalorder %s28, 0
      %p113 = por %p111, %p112
      %p114 = scmp.ne.s32.totalorder %s100, %s101
      %p115 = scmp.eq.s32.totalorder %s29, 1
      %p116 = por %p114, %p115
      %p118 = scmp.ne.s32.totalorder %s101, %s117
      %p119 = scmp.eq.s32.totalorder %s29, 0
      %p120 = por %p118, %p119
      %s121 = ssub.s32 %s31, %s38
      %p122 = scmp.eq.s32.totalorder %s121, 0
      %s124 = sadd.s32 %s123, 1
      %s125 = scalar_select %p122, %s123, %s124
      %p128 = pneg %p122
      %p129 = scmp.eq.s32.totalorder %s23, 1
      %p130 = por %p128, %p129
      %p131 = scmp.ne.s32.totalorder %s123, %s126
      %p132 = scmp.eq.s32.totalorder %s23, 0
      %p133 = por %p131, %p132
      %p134 = scmp.ne.s32.totalorder %s123, %s126
      %p135 = scmp.eq.s32.totalorder %s28, 1
      %p136 = por %p134, %p135
      %p137 = scmp.ne.s32.totalorder %s126, %s127
      %p138 = scmp.eq.s32.totalorder %s28, 0
      %p139 = por %p137, %p138
      %p140 = scmp.ne.s32.totalorder %s126, %s127
      %p141 = scmp.eq.s32.totalorder %s29, 1
      %p142 = por %p140, %p141
      %p144 = scmp.ne.s32.totalorder %s127, %s143
      %p145 = scmp.eq.s32.totalorder %s29, 0
      %p146 = por %p144, %p145
      %s147 = ssub.s32 %s31, %s38
      %p148 = scmp.eq.s32.totalorder %s147, 0
      %s150 = sadd.s32 %s149, 1
      %s151 = scalar_select %p148, %s149, %s150
      %p154 = pneg %p148
      %p155 = scmp.eq.s32.totalorder %s23, 1
      %p156 = por %p154, %p155
      %p157 = scmp.ne.s32.totalorder %s149, %s152
      %p158 = scmp.eq.s32.totalorder %s23, 0
      %p159 = por %p157, %p158
      %p160 = scmp.ne.s32.totalorder %s149, %s152
      %p161 = scmp.eq.s32.totalorder %s28, 1
      %p162 = por %p160, %p161
      %p163 = scmp.ne.s32.totalorder %s152, %s153
      %p164 = scmp.eq.s32.totalorder %s28, 0
      %p165 = por %p163, %p164
      %p166 = scmp.ne.s32.totalorder %s152, %s153
      %p167 = scmp.eq.s32.totalorder %s29, 1
      %p168 = por %p166, %p167
      %p170 = scmp.ne.s32.totalorder %s153, %s169
      %p171 = scmp.eq.s32.totalorder %s29, 0
      %p172 = por %p170, %p171
      %s173 = ssub.s32 %s31, %s38
      %p174 = scmp.eq.s32.totalorder %s173, 0
      %s176 = sadd.s32 %s175, 1
      %s177 = scalar_select %p174, %s175, %s176
      %p180 = pneg %p174
      %p181 = scmp.eq.s32.totalorder %s23, 1
      %p182 = por %p180, %p181
      %p183 = scmp.ne.s32.totalorder %s175, %s178
      %p184 = scmp.eq.s32.totalorder %s23, 0
      %p185 = por %p183, %p184
      %p186 = scmp.ne.s32.totalorder %s175, %s178
      %p187 = scmp.eq.s32.totalorder %s28, 1
      %p188 = por %p186, %p187
      %p189 = scmp.ne.s32.totalorder %s178, %s179
      %p190 = scmp.eq.s32.totalorder %s28, 0
      %p191 = por %p189, %p190
      %p192 = scmp.ne.s32.totalorder %s178, %s179
      %p193 = scmp.eq.s32.totalorder %s29, 1
      %p194 = por %p192, %p193
      %p196 = scmp.ne.s32.totalorder %s179, %s195
      %p197 = scmp.eq.s32.totalorder %s29, 0
      %p198 = por %p196, %p197
      %s199 = ssub.s32 %s31, %s38
      %p200 = scmp.eq.s32.totalorder %s199, 0
      %s202 = sadd.s32 %s201, 1
      %s203 = scalar_select %p200, %s201, %s202
      %p206 = pneg %p200
      %p207 = scmp.eq.s32.totalorder %s23, 1
      %p208 = por %p206, %p207
      %p209 = scmp.ne.s32.totalorder %s201, %s204
      %p210 = scmp.eq.s32.totalorder %s23, 0
      %p211 = por %p209, %p210
      %p212 = scmp.ne.s32.totalorder %s201, %s204
      %p213 = scmp.eq.s32.totalorder %s28, 1
      %p214 = por %p212, %p213
      %p215 = scmp.ne.s32.totalorder %s204, %s205
      %p216 = scmp.eq.s32.totalorder %s28, 0
      %p217 = por %p215, %p216
      %p218 = scmp.ne.s32.totalorder %s204, %s205
      %p219 = scmp.eq.s32.totalorder %s29, 1
      %p220 = por %p218, %p219
      %p222 = scmp.ne.s32.totalorder %s205, %s221
      %p223 = scmp.eq.s32.totalorder %s29, 0
      %p224 = por %p222, %p223
      %s225 = ssub.s32 %s31, %s38
      %p226 = scmp.eq.s32.totalorder %s225, 0
      %s228 = sadd.s32 %s227, 1
      %s229 = scalar_select %p226, %s227, %s228
      %p232 = pneg %p226
      %p233 = scmp.eq.s32.totalorder %s23, 1
      %p234 = por %p232, %p233
      %p235 = scmp.ne.s32.totalorder %s227, %s230
      %p236 = scmp.eq.s32.totalorder %s23, 0
      %p237 = por %p235, %p236
      %p238 = scmp.ne.s32.totalorder %s227, %s230
      %p239 = scmp.eq.s32.totalorder %s28, 1
      %p240 = por %p238, %p239
      %p241 = scmp.ne.s32.totalorder %s230, %s231
      %p242 = scmp.eq.s32.totalorder %s28, 0
      %p243 = por %p241, %p242
      %p244 = scmp.ne.s32.totalorder %s230, %s231
      %p245 = scmp.eq.s32.totalorder %s29, 1
      %p246 = por %p244, %p245
      %p248 = scmp.ne.s32.totalorder %s231, %s247
      %p249 = scmp.eq.s32.totalorder %s29, 0
      %p250 = por %p248, %p249
      %s251 = ssub.s32 %s31, %s38
      %p252 = scmp.eq.s32.totalorder %s251, 0
      %s254 = sadd.s32 %s253, 1
      %s255 = scalar_select %p252, %s253, %s254
      %p258 = pneg %p252
      %p259 = scmp.eq.s32.totalorder %s23, 1
      %p260 = por %p258, %p259
      %p261 = scmp.ne.s32.totalorder %s253, %s256
      %p262 = scmp.eq.s32.totalorder %s23, 0
      %p263 = por %p261, %p262
      %p264 = scmp.ne.s32.totalorder %s253, %s256
      %p265 = scmp.eq.s32.totalorder %s28, 1
      %p266 = por %p264, %p265
      %p267 = scmp.ne.s32.totalorder %s256, %s257
      %p268 = scmp.eq.s32.totalorder %s28, 0
      %p269 = por %p267, %p268
      %p270 = scmp.ne.s32.totalorder %s256, %s257
      %p271 = scmp.eq.s32.totalorder %s29, 1
      %p272 = por %p270, %p271
      %p274 = scmp.ne.s32.totalorder %s257, %s273
      %p275 = scmp.eq.s32.totalorder %s29, 0
      %p276 = por %p274, %p275
      %s277 = ssub.s32 %s31, %s38
      %p278 = scmp.eq.s32.totalorder %s277, 0
      %s280 = sadd.s32 %s279, 1
      %s281 = scalar_select %p278, %s279, %s280
      %p284 = pneg %p278
      %p285 = scmp.eq.s32.totalorder %s23, 1
      %p286 = por %p284, %p285
      %p287 = scmp.ne.s32.totalorder %s279, %s282
      %p288 = scmp.eq.s32.totalorder %s23, 0
      %p289 = por %p287, %p288
      %p290 = scmp.ne.s32.totalorder %s279, %s282
      %p291 = scmp.eq.s32.totalorder %s28, 1
      %p292 = por %p290, %p291
      %p293 = scmp.ne.s32.totalorder %s282, %s283
      %p294 = scmp.eq.s32.totalorder %s28, 0
      %p295 = por %p293, %p294
      %p296 = scmp.ne.s32.totalorder %s282, %s283
      %p297 = scmp.eq.s32.totalorder %s29, 1
      %p298 = por %p296, %p297
      %p300 = scmp.ne.s32.totalorder %s283, %s299
      %p301 = scmp.eq.s32.totalorder %s29, 0
      %p302 = por %p300, %p301
      %s303 = ssub.s32 %s31, %s38
      %p304 = scmp.eq.s32.totalorder %s303, 0
      %s306 = sadd.s32 %s305, 1
      %s307 = scalar_select %p304, %s305, %s306
      %p310 = pneg %p304
      %p311 = scmp.eq.s32.totalorder %s23, 1
      %p312 = por %p310, %p311
      %p313 = scmp.ne.s32.totalorder %s305, %s308
      %p314 = scmp.eq.s32.totalorder %s23, 0
      %p315 = por %p313, %p314
      %p316 = scmp.ne.s32.totalorder %s305, %s308
      %p317 = scmp.eq.s32.totalorder %s28, 1
      %p318 = por %p316, %p317
      %p319 = scmp.ne.s32.totalorder %s308, %s309
      %p320 = scmp.eq.s32.totalorder %s28, 0
      %p321 = por %p319, %p320
      %p322 = scmp.ne.s32.totalorder %s308, %s309
      %p323 = scmp.eq.s32.totalorder %s29, 1
      %p324 = por %p322, %p323
      %p326 = scmp.ne.s32.totalorder %s309, %s325
      %p327 = scmp.eq.s32.totalorder %s29, 0
      %p328 = por %p326, %p327
      %s329 = ssub.s32 %s31, %s38
      %p330 = scmp.eq.s32.totalorder %s329, 0
      %s332 = sadd.s32 %s331, 1
      %s333 = scalar_select %p330, %s331, %s332
      %p336 = pneg %p330
      %p337 = scmp.eq.s32.totalorder %s23, 1
      %p338 = por %p336, %p337
      %p339 = scmp.ne.s32.totalorder %s331, %s334
      %p340 = scmp.eq.s32.totalorder %s23, 0
      %p341 = por %p339, %p340
      %p342 = scmp.ne.s32.totalorder %s331, %s334
      %p343 = scmp.eq.s32.totalorder %s28, 1
      %p344 = por %p342, %p343
      %p345 = scmp.ne.s32.totalorder %s334, %s335
      %p346 = scmp.eq.s32.totalorder %s28, 0
      %p347 = por %p345, %p346
      %p348 = scmp.ne.s32.totalorder %s334, %s335
      %p349 = scmp.eq.s32.totalorder %s29, 1
      %p350 = por %p348, %p349
      %p352 = scmp.ne.s32.totalorder %s335, %s351
      %p353 = scmp.eq.s32.totalorder %s29, 0
      %p354 = por %p352, %p353
      %s355 = ssub.s32 %s31, %s38
      %p356 = scmp.eq.s32.totalorder %s355, 0
      %s358 = sadd.s32 %s357, 1
      %s359 = scalar_select %p356, %s357, %s358
      %p362 = pneg %p356
      %p363 = scmp.eq.s32.totalorder %s23, 1
      %p364 = por %p362, %p363
      %p365 = scmp.ne.s32.totalorder %s357, %s360
      %p366 = scmp.eq.s32.totalorder %s23, 0
      %p367 = por %p365, %p366
      %p368 = scmp.ne.s32.totalorder %s357, %s360
      %p369 = scmp.eq.s32.totalorder %s28, 1
      %p370 = por %p368, %p369
      %p371 = scmp.ne.s32.totalorder %s360, %s361
      %p372 = scmp.eq.s32.totalorder %s28, 0
      %p373 = por %p371, %p372
      %p374 = scmp.ne.s32.totalorder %s360, %s361
      %p375 = scmp.eq.s32.totalorder %s29, 1
      %p376 = por %p374, %p375
      %p378 = scmp.ne.s32.totalorder %s361, %s377
      %p379 = scmp.eq.s32.totalorder %s29, 0
      %p380 = por %p378, %p379
      %s381 = ssub.s32 %s31, %s38
      %p382 = scmp.eq.s32.totalorder %s381, 0
      %s384 = sadd.s32 %s383, 1
      %s385 = scalar_select %p382, %s383, %s384
      %p388 = pneg %p382
      %p389 = scmp.eq.s32.totalorder %s23, 1
      %p390 = por %p388, %p389
      %p391 = scmp.ne.s32.totalorder %s383, %s386
      %p392 = scmp.eq.s32.totalorder %s23, 0
      %p393 = por %p391, %p392
      %p394 = scmp.ne.s32.totalorder %s383, %s386
      %p395 = scmp.eq.s32.totalorder %s28, 1
      %p396 = por %p394, %p395
      %p397 = scmp.ne.s32.totalorder %s386, %s387
      %p398 = scmp.eq.s32.totalorder %s28, 0
      %p399 = por %p397, %p398
      %p400 = scmp.ne.s32.totalorder %s386, %s387
      %p401 = scmp.eq.s32.totalorder %s29, 1
      %p402 = por %p400, %p401
      %p404 = scmp.ne.s32.totalorder %s387, %s403
      %p405 = scmp.eq.s32.totalorder %s29, 0
      %p406 = por %p404, %p405
      %s407 = ssub.s32 %s30, %s42
      %p408 = scmp.eq.s32.totalorder %s407, 0
      %s410 = sadd.s32 %s409, 1
      %s411 = scalar_select %p408, %s409, %s410
      %p414 = pneg %p408
      %p415 = scmp.eq.s32.totalorder %s23, 1
      %p416 = por %p414, %p415
      %p417 = scmp.ne.s32.totalorder %s409, %s412
      %p418 = scmp.eq.s32.totalorder %s23, 0
      %p419 = por %p417, %p418
      %p420 = scmp.ne.s32.totalorder %s409, %s412
      %p421 = scmp.eq.s32.totalorder %s28, 1
      %p422 = por %p420, %p421
      %p423 = scmp.ne.s32.totalorder %s412, %s413
      %p424 = scmp.eq.s32.totalorder %s28, 0
      %p425 = por %p423, %p424
      %p426 = scmp.ne.s32.totalorder %s412, %s413
      %p427 = scmp.eq.s32.totalorder %s29, 1
      %p428 = por %p426, %p427
      %p430 = scmp.ne.s32.totalorder %s413, %s429
      %p431 = scmp.eq.s32.totalorder %s29, 0
      %p432 = por %p430, %p431
      %p433 = scmp.le.s32.totalorder 1, %s23
      %p434 = scmp.lt.s32.totalorder %s23, 3
      %p435 = pnand %p433, %p434
      %p436 = pneg %p435
      // Predicated region
      $region9: #{tpu_custom_call.1} parent=5 // pred_check
        _
      $region10: #{tpu_custom_call.1} parent=5 // pred_check_branch
        %438 = sbr.rel (%p435) target = $region12
      $region11: #{tpu_custom_call.1} parent=5 // pred_region
        %s439 = ssub.s32 %s23, 1
        // Predicated region
        $region13: #{tpu_custom_call.1} parent=11 // pred_check
          %p440 = pneg %p61
        $region14: #{tpu_custom_call.1} parent=11 // pred_check_branch
          %442 = sbr.rel (%p440) target = $region16
        $region15: #{tpu_custom_call.1} parent=11 // pred_region
          %s443 = smul.u32 2, %s32
          %s445 = ssub.s32 256, 256
          %446 = vsyncadd [#allocation5], %s445
          %s447 = smul.addr %s443, 128
          %s448 = scalar_lea.hbm %s0, %s447
          %s449 = sshll.u32 [#allocation4], 4
          %s450 = int_to_ptr.vmem [resolvable:$true] %s449
          %455 = dma.hbm_to_vmem [thread:$0]  %s448, 256, %s450, [#allocation5], 128, 128, 8
        $region16: #{tpu_custom_call.1} parent=11 // pred_fallthru
          _
        // Predicated region
        $region17: #{tpu_custom_call.1} parent=11 // pred_check
          %p456 = pneg %p87
        $region18: #{tpu_custom_call.1} parent=11 // pred_check_branch
          %458 = sbr.rel (%p456) target = $region20
        $region19: #{tpu_custom_call.1} parent=11 // pred_region
          %s459 = smul.u32 2, %s32
          %s461 = ssub.s32 32, 32
          %462 = vsyncadd [#allocation8], %s461
          %s463 = smul.addr %s459, 16
          %s464 = scalar_lea.hbm %s1, %s463
          %s465 = sshll.u32 [#allocation7], 4
          %s466 = int_to_ptr.vmem [resolvable:$true] %s465
          %471 = dma.hbm_to_vmem [thread:$0]  %s464, 32, %s466, [#allocation8], 16, 16, 1
        $region20: #{tpu_custom_call.1} parent=11 // pred_fallthru
          _
      $region12: #{tpu_custom_call.1} parent=5 // pred_fallthru
        _
      %p472 = scmp.lt.s32.totalorder %s23, 2
      // Predicated region
      $region21: #{tpu_custom_call.1} parent=5 // pred_check
        %p473 = pneg %p472
      $region22: #{tpu_custom_call.1} parent=5 // pred_check_branch
        %475 = sbr.rel (%p473) target = $region24
      $region23: #{tpu_custom_call.1} parent=5 // pred_region
        // Predicated region
        $region25: #{tpu_custom_call.1} parent=23 // pred_check
          %p476 = pneg %p107
        $region26: #{tpu_custom_call.1} parent=23 // pred_check_branch
          %478 = sbr.rel (%p476) target = $region28
        $region27: #{tpu_custom_call.1} parent=23 // pred_region
          %p479 = scmp.lt.s32.totalorder %s31, 1
          %s480 = scalar_select %p479, %s31, 1
          %s481 = smul.addr %s480, 4
          %s482 = smul.addr %s481, 4
          %s483 = scalar_lea.vmem %s2, %s482
        $region28: #{tpu_custom_call.1} parent=23 // pred_fallthru
          _
        // Predicated region
        $region29: #{tpu_custom_call.1} parent=23 // pred_check
          %p484 = pneg %p133
        $region30: #{tpu_custom_call.1} parent=23 // pred_check_branch
          %486 = sbr.rel (%p484) target = $region32
        $region31: #{tpu_custom_call.1} parent=23 // pred_region
          %p487 = scmp.lt.s32.totalorder %s31, 1
          %s488 = scalar_select %p487, %s31, 1
          %s489 = scalar_lea.vmem %s3, %s488
        $region32: #{tpu_custom_call.1} parent=23 // pred_fallthru
          _
        // Predicated region
        $region33: #{tpu_custom_call.1} parent=23 // pred_check
          %p490 = pneg %p159
        $region34: #{tpu_custom_call.1} parent=23 // pred_check_branch
          %492 = sbr.rel (%p490) target = $region36
        $region35: #{tpu_custom_call.1} parent=23 // pred_region
          %p493 = scmp.lt.s32.totalorder %s31, 1
          %s494 = scalar_select %p493, %s31, 1
          %s495 = smul.addr %s494, 4
          %s496 = smul.addr %s495, 4
          %s497 = scalar_lea.vmem %s4, %s496
        $region36: #{tpu_custom_call.1} parent=23 // pred_fallthru
          _
        // Predicated region
        $region37: #{tpu_custom_call.1} parent=23 // pred_check
          %p498 = pneg %p185
        $region38: #{tpu_custom_call.1} parent=23 // pred_check_branch
          %500 = sbr.rel (%p498) target = $region40
        $region39: #{tpu_custom_call.1} parent=23 // pred_region
          %p501 = scmp.lt.s32.totalorder %s31, 1
          %s502 = scalar_select %p501, %s31, 1
          %s503 = scalar_lea.vmem %s5, %s502
        $region40: #{tpu_custom_call.1} parent=23 // pred_fallthru
          _
        // Predicated region
        $region41: #{tpu_custom_call.1} parent=23 // pred_check
          %p504 = pneg %p211
        $region42: #{tpu_custom_call.1} parent=23 // pred_check_branch
          %506 = sbr.rel (%p504) target = $region44
        $region43: #{tpu_custom_call.1} parent=23 // pred_region
          %p507 = scmp.lt.s32.totalorder %s31, 1
          %s508 = scalar_select %p507, %s31, 1
          %s509 = scalar_lea.vmem %s6, %s508
        $region44: #{tpu_custom_call.1} parent=23 // pred_fallthru
          _
        // Predicated region
        $region45: #{tpu_custom_call.1} parent=23 // pred_check
          %p510 = pneg %p237
        $region46: #{tpu_custom_call.1} parent=23 // pred_check_branch
          %512 = sbr.rel (%p510) target = $region48
        $region47: #{tpu_custom_call.1} parent=23 // pred_region
          %p513 = scmp.lt.s32.totalorder %s31, 1
          %s514 = scalar_select %p513, %s31, 1
          %s515 = scalar_lea.vmem %s7, %s514
        $region48: #{tpu_custom_call.1} parent=23 // pred_fallthru
          _
        // Predicated region
        $region49: #{tpu_custom_call.1} parent=23 // pred_check
          %p516 = pneg %p263
        $region50: #{tpu_custom_call.1} parent=23 // pred_check_branch
          %518 = sbr.rel (%p516) target = $region52
        $region51: #{tpu_custom_call.1} parent=23 // pred_region
          %p519 = scmp.lt.s32.totalorder %s31, 1
          %s520 = scalar_select %p519, %s31, 1
          %s521 = smul.addr %s520, 4
          %s522 = smul.addr %s521, 4
          %s523 = scalar_lea.vmem %s8, %s522
        $region52: #{tpu_custom_call.1} parent=23 // pred_fallthru
          _
        // Predicated region
        $region53: #{tpu_custom_call.1} parent=23 // pred_check
          %p524 = pneg %p289
        $region54: #{tpu_custom_call.1} parent=23 // pred_check_branch
          %526 = sbr.rel (%p524) target = $region56
        $region55: #{tpu_custom_call.1} parent=23 // pred_region
          %p527 = scmp.lt.s32.totalorder %s31, 1
          %s528 = scalar_select %p527, %s31, 1
          %s529 = scalar_lea.vmem %s9, %s528
        $region56: #{tpu_custom_call.1} parent=23 // pred_fallthru
          _
        // Predicated region
        $region57: #{tpu_custom_call.1} parent=23 // pred_check
          %p530 = pneg %p315
        $region58: #{tpu_custom_call.1} parent=23 // pred_check_branch
          %532 = sbr.rel (%p530) target = $region60
        $region59: #{tpu_custom_call.1} parent=23 // pred_region
          %p533 = scmp.lt.s32.totalorder %s31, 1
          %s534 = scalar_select %p533, %s31, 1
          %s535 = smul.addr %s534, 8
          %s536 = smul.addr %s535, 4
          %s537 = scalar_lea.vmem %s10, %s536
        $region60: #{tpu_custom_call.1} parent=23 // pred_fallthru
          _
        // Predicated region
        $region61: #{tpu_custom_call.1} parent=23 // pred_check
          %p538 = pneg %p341
        $region62: #{tpu_custom_call.1} parent=23 // pred_check_branch
          %540 = sbr.rel (%p538) target = $region64
        $region63: #{tpu_custom_call.1} parent=23 // pred_region
          %p541 = scmp.lt.s32.totalorder %s31, 1
          %s542 = scalar_select %p541, %s31, 1
          %s543 = scalar_lea.vmem %s11, %s542
        $region64: #{tpu_custom_call.1} parent=23 // pred_fallthru
          _
        // Predicated region
        $region65: #{tpu_custom_call.1} parent=23 // pred_check
          %p544 = pneg %p367
        $region66: #{tpu_custom_call.1} parent=23 // pred_check_branch
          %546 = sbr.rel (%p544) target = $region68
        $region67: #{tpu_custom_call.1} parent=23 // pred_region
          %p547 = scmp.lt.s32.totalorder %s31, 1
          %s548 = scalar_select %p547, %s31, 1
          %s549 = scalar_lea.vmem %s12, %s548
        $region68: #{tpu_custom_call.1} parent=23 // pred_fallthru
          _
        // Predicated region
        $region69: #{tpu_custom_call.1} parent=23 // pred_check
          %p550 = pneg %p393
        $region70: #{tpu_custom_call.1} parent=23 // pred_check_branch
          %552 = sbr.rel (%p550) target = $region72
        $region71: #{tpu_custom_call.1} parent=23 // pred_region
          %p553 = scmp.lt.s32.totalorder %s31, 1
          %s554 = scalar_select %p553, %s31, 1
          %s555 = scalar_lea.vmem %s13, %s554
        $region72: #{tpu_custom_call.1} parent=23 // pred_fallthru
          _
      $region24: #{tpu_custom_call.1} parent=5 // pred_fallthru
        _
      %p556 = scmp.le.s32.totalorder 1, %s23
      %p557 = scmp.lt.s32.totalorder %s23, 3
      %p558 = pnand %p556, %p557
      %p559 = pneg %p558
      // Predicated region
      $region73: #{tpu_custom_call.1} parent=5 // pred_check
        _
      $region74: #{tpu_custom_call.1} parent=5 // pred_check_branch
        %561 = sbr.rel (%p558) target = $region76
      $region75: #{tpu_custom_call.1} parent=5 // pred_region
        %s562 = ssub.s32 %s23, 1
        // Predicated region
        $region77: #{tpu_custom_call.1} parent=75 // pred_check
          %p563 = pneg %p61
        $region78: #{tpu_custom_call.1} parent=75 // pred_check_branch
          %565 = sbr.rel (%p563) target = $region80
        $region79: #{tpu_custom_call.1} parent=75 // pred_region
          %566 = dma.done [#allocation5], 256
        $region80: #{tpu_custom_call.1} parent=75 // pred_fallthru
          _
        // Predicated region
        $region81: #{tpu_custom_call.1} parent=75 // pred_check
          %p567 = pneg %p87
        $region82: #{tpu_custom_call.1} parent=75 // pred_check_branch
          %569 = sbr.rel (%p567) target = $region84
        $region83: #{tpu_custom_call.1} parent=75 // pred_region
          %570 = dma.done [#allocation8], 32
        $region84: #{tpu_custom_call.1} parent=75 // pred_fallthru
          _
        %p571 = pneg %p61
        %p572 = pneg %p58
        %p573 = pneg %p87
        %p574 = pneg %p84
        %p575 = scmp.lt.s32.totalorder %s33, 1
        %s576 = scalar_select %p575, %s33, 1
        %s577 = smul.addr %s576, 4
        %s578 = smul.addr %s577, 4
        %s579 = scalar_lea.vmem %s2, %s578
        %p580 = pneg %p113
        %p581 = pneg %p110
        %p582 = scmp.lt.s32.totalorder %s33, 1
        %s583 = scalar_select %p582, %s33, 1
        %s584 = scalar_lea.vmem %s3, %s583
        %p585 = pneg %p139
        %p586 = pneg %p136
        %p587 = scmp.lt.s32.totalorder %s33, 1
        %s588 = scalar_select %p587, %s33, 1
        %s589 = smul.addr %s588, 4
        %s590 = smul.addr %s589, 4
        %s591 = scalar_lea.vmem %s4, %s590
        %p592 = pneg %p165
        %p593 = pneg %p162
        %p594 = scmp.lt.s32.totalorder %s33, 1
        %s595 = scalar_select %p594, %s33, 1
        %s596 = scalar_lea.vmem %s5, %s595
        %p597 = pneg %p191
        %p598 = pneg %p188
        %p599 = scmp.lt.s32.totalorder %s33, 1
        %s600 = scalar_select %p599, %s33, 1
        %s601 = scalar_lea.vmem %s6, %s600
        %p602 = pneg %p217
        %p603 = pneg %p214
        %p604 = scmp.lt.s32.totalorder %s33, 1
        %s605 = scalar_select %p604, %s33, 1
        %s606 = scalar_lea.vmem %s7, %s605
        %p607 = pneg %p243
        %p608 = pneg %p240
        %p609 = scmp.lt.s32.totalorder %s33, 1
        %s610 = scalar_select %p609, %s33, 1
        %s611 = smul.addr %s610, 4
        %s612 = smul.addr %s611, 4
        %s613 = scalar_lea.vmem %s8, %s612
        %p614 = pneg %p269
        %p615 = pneg %p266
        %p616 = scmp.lt.s32.totalorder %s33, 1
        %s617 = scalar_select %p616, %s33, 1
        %s618 = scalar_lea.vmem %s9, %s617
        %p619 = pneg %p295
        %p620 = pneg %p292
        %p621 = scmp.lt.s32.totalorder %s33, 1
        %s622 = scalar_select %p621, %s33, 1
        %s623 = smul.addr %s622, 8
        %s624 = smul.addr %s623, 4
        %s625 = scalar_lea.vmem %s10, %s624
        %p626 = pneg %p321
        %p627 = pneg %p318
        %p628 = scmp.lt.s32.totalorder %s33, 1
        %s629 = scalar_select %p628, %s33, 1
        %s630 = scalar_lea.vmem %s11, %s629
        %p631 = pneg %p347
        %p632 = pneg %p344
        %p633 = scmp.lt.s32.totalorder %s33, 1
        %s634 = scalar_select %p633, %s33, 1
        %s635 = scalar_lea.vmem %s12, %s634
        %p636 = pneg %p373
        %p637 = pneg %p370
        %p638 = scmp.lt.s32.totalorder %s33, 1
        %s639 = scalar_select %p638, %s33, 1
        %s640 = scalar_lea.vmem %s13, %s639
        %p641 = pneg %p399
        %p642 = pneg %p396
        %p643 = pneg %p425
        %p644 = pneg %p422
        %s645 = smul.u32 2, %s32
        %s646 = smul.u32 2, %s32
        %p647 = scmp.lt.s32.totalorder %s33, 1
        %s648 = scalar_select %p647, %s33, 1
        %s649 = smul.addr %s648, 4
        %s650 = smul.addr %s649, 4
        %s651 = scalar_lea.vmem %s2, %s650
        %p652 = scmp.lt.s32.totalorder %s33, 1
        %s653 = scalar_select %p652, %s33, 1
        %s654 = scalar_lea.vmem %s3, %s653
        %p655 = scmp.lt.s32.totalorder %s33, 1
        %s656 = scalar_select %p655, %s33, 1
        %s657 = smul.addr %s656, 4
        %s658 = smul.addr %s657, 4
        %s659 = scalar_lea.vmem %s4, %s658
        %p660 = scmp.lt.s32.totalorder %s33, 1
        %s661 = scalar_select %p660, %s33, 1
        %s662 = scalar_lea.vmem %s5, %s661
        %p663 = scmp.lt.s32.totalorder %s33, 1
        %s664 = scalar_select %p663, %s33, 1
        %s665 = scalar_lea.vmem %s6, %s664
        %p666 = scmp.lt.s32.totalorder %s33, 1
        %s667 = scalar_select %p666, %s33, 1
        %s668 = scalar_lea.vmem %s7, %s667
        %p669 = scmp.lt.s32.totalorder %s33, 1
        %s670 = scalar_select %p669, %s33, 1
        %s671 = smul.addr %s670, 4
        %s672 = smul.addr %s671, 4
        %s673 = scalar_lea.vmem %s8, %s672
        %p674 = scmp.lt.s32.totalorder %s33, 1
        %s675 = scalar_select %p674, %s33, 1
        %s676 = scalar_lea.vmem %s9, %s675
        %p677 = scmp.lt.s32.totalorder %s33, 1
        %s678 = scalar_select %p677, %s33, 1
        %s679 = smul.addr %s678, 8
        %s680 = smul.addr %s679, 4
        %s681 = scalar_lea.vmem %s10, %s680
        %p682 = scmp.lt.s32.totalorder %s33, 1
        %s683 = scalar_select %p682, %s33, 1
        %s684 = scalar_lea.vmem %s11, %s683
        %p685 = scmp.lt.s32.totalorder %s33, 1
        %s686 = scalar_select %p685, %s33, 1
        %s687 = scalar_lea.vmem %s12, %s686
        %p688 = scmp.lt.s32.totalorder %s33, 1
        %s689 = scalar_select %p688, %s33, 1
        %s690 = scalar_lea.vmem %s13, %s689
        %s691 = smul.u32 2, %s32
        %p693 = scmp.eq.s32.totalorder %s33, 0
        // Predicated region
        $region85: #{tpu_custom_call.1} parent=75 // pred_check
          %p694 = pneg %p693
        $region86: #{tpu_custom_call.1} parent=75 // pred_check_branch
          %696 = sbr.rel (%p694) target = $region88
        $region87: #{tpu_custom_call.1} parent=75 // pred_region
          %v697 = vld [vmem:[#allocation4] sm:$0xff]
          %v698 = vld [vmem:[#allocation4 + $0x8] sm:$0xff]
          %vm699 = vcmask 261120
          %700 = vst.msk [vmem:[#allocation9] sm:$0xff] %vm699, %v697
          %701 = vst.msk [vmem:[#allocation9 + $0x8] sm:$0xff] %vm699, %v698
        $region88: #{tpu_custom_call.1} parent=75 // pred_fallthru
          _
        %v702 = vld [vmem:[#allocation9] sm:$0xff]
        %v703 = vld [vmem:[#allocation9 + $0x8] sm:$0xff]
        %v704 = vpack.c.bf16 %v703, %v702
        %v705 = vld [vmem:[%s651] sm:$0xf]
        %v706 = vld [vmem:[%s651 + $0x4] sm:$0xf]
        %v707 = vld [vmem:[%s651 + $0x8] sm:$0xf]
        %v708 = vld [vmem:[%s651 + $0xc] sm:$0xf]
        %v709 = vld [vmem:[%s654] sm:$0x1]
        %v711 = vlaneseq
        %v712 = vshrl.u32 %v711, 7
        %v713 = vsub.s32 0, %v712
        %v714 = vrot.slane %v709, %v713
        %v720 = vunpack.c.l.b16 %v705
        %v721 = vunpack.c.l.b16 %v706
        %v722 = vunpack.c.l.b16 %v707
        %v723 = vunpack.c.l.b16 %v708
        %v724 = vpack.c.b16 %v721, %v720
        %v725 = vpack.c.b16 %v723, %v722
        %vm728 = vcmask 261120
        %v730 = vsel %vm728, %v704, 0
        %732 = vmatprep.subr.bf16.mxu0 0
        %733 = vmatpush1.bf16.msra.mxu0 0
        %734 = vmatprep.subr.bf16.mxu0 0
        %735 = vmatpush1.bf16.msra.mxu0 0
        %736 = vmatprep.subr.bf16.mxu0 0
        %737 = vmatpush1.bf16.msra.mxu0 0
        %738 = vmatprep.subr.bf16.mxu0 0
        %739 = vmatpush1.bf16.msra.mxu0 0
        %740 = vmatprep.subr.bf16.mxu0 0
        %741 = vmatpush1.bf16.msra.mxu0 0
        %742 = vmatprep.subr.bf16.mxu0 0
        %743 = vmatpush1.bf16.msra.mxu0 0
        %744 = vmatprep.subr.bf16.mxu0 0
        %745 = vmatpush1.bf16.msra.mxu0 %v725
        %746 = vmatprep.subr.bf16.mxu0 0
        %747 = vmatpush1.bf16.msra.mxu0 %v724
        %748 = vmatprep.subr.bf16.mxu0 0
        %749 = vmatpush2.bf16.msra.mxu0 0
        %750 = vmatprep.subr.bf16.mxu0 0
        %751 = vmatpush2.bf16.msra.mxu0 0
        %752 = vmatprep.subr.bf16.mxu0 0
        %753 = vmatpush2.bf16.msra.mxu0 0
        %754 = vmatprep.subr.bf16.mxu0 0
        %755 = vmatpush2.bf16.msra.mxu0 0
        %756 = vmatprep.subr.bf16.mxu0 0
        %757 = vmatpush2.bf16.msra.mxu0 0
        %758 = vmatprep.subr.bf16.mxu0 0
        %759 = vmatpush2.bf16.msra.mxu0 0
        %760 = vmatprep.subr.bf16.mxu0 0
        %761 = vmatpush2.bf16.msra.mxu0 0
        %762 = vmatprep.subr.bf16.mxu0 0
        %763 = vmatpush2.bf16.msra.mxu0 0
        %764 = vmatprep.mubr.bf16.mxu0 0
        %765 = vmatmul.mubr.bf16.gmra.mxu0 %v730
        %v766 = vpop.f32.mrf.mxu0
        %v767 = vadd.f32 %v714, %v766
        %v768 = vpop.f32.mrf.mxu0
        %v769 = vpop.f32.mrf.mxu0
        %v770 = vadd.f32 %v714, %v769
        %v771 = vpop.f32.mrf.mxu0
        %772 = vdwg.mxu0
        %v773 = vpack.c.bf16 %v770, %v767
        %v775 = vunpack.c.l.b16 %v773
        %v776 = vunpack.c.h.b16 %v773
        %v777 = vpack.c.b16 %v775, %v775
        %v778 = vpack.c.b16 %v776, %v776
        %vm781 = vcmask 781312
        %782 = vst.msk [vmem:[#allocation2] sm:$0xf] %vm781, %v777
        %783 = vst.msk [vmem:[#allocation2 + $0x4] sm:$0xf] %vm781, %v778
        loop: start=0, step=1, limit=2
        $region89: #{tpu_custom_call.1} parent=75 // loop_pre_header
          _
        $region90: #{tpu_custom_call.1} parent=75 // loop_header
          %s785 = sphi 0, %s789
          %p786 = scmp.ge.s32.totalorder %s785, 2
        $region91: #{tpu_custom_call.1} parent=75 // loop_header_branch
          %788 = sbr.rel (%p786) target = $region95
        $region92: #{tpu_custom_call.1} parent=75 // loop_body
          %s790 = smul.addr %s785, 4
          %s791 = scalar_lea.vmem [#allocation2], %s790
          %v792 = vld [vmem:[%s791] sm:$0xf]
          %793 = vxpose.xlu0.c.b16.start [1/8] %v792, 128
          %794 = vxpose.xlu0.c.b16.cont [2/8] 0, 128
          %795 = vxpose.xlu0.c.b16.cont [3/8] 0, 128
          %796 = vxpose.xlu0.c.b16.cont [4/8] 0, 128
          %797 = vxpose.xlu0.c.b16.cont [5/8] 0, 128
          %798 = vxpose.xlu0.c.b16.cont [6/8] 0, 128
          %799 = vxpose.xlu0.c.b16.cont [7/8] 0, 128
          %800 = vxpose.xlu0.c.b16.end [8/8] 0, 128
          %v801 = vpop.trf.xlu0
          %v802 = vpop.trf.xlu0
          %v803 = vpop.trf.xlu0
          %v804 = vpop.trf.xlu0
          %v805 = vpop.trf.xlu0
          %v806 = vpop.trf.xlu0
          %v807 = vpop.trf.xlu0
          %v808 = vpop.trf.xlu0
          %v815 = vunpack.c.l.b16 %v801
          %v816 = vunpack.c.h.b16 %v801
          %v817 = vunpack.c.l.b16 %v802
          %v818 = vunpack.c.h.b16 %v802
          %v819 = vunpack.c.l.b16 %v803
          %v820 = vunpack.c.h.b16 %v803
          %v821 = vunpack.c.l.b16 %v804
          %v822 = vunpack.c.h.b16 %v804
          %v823 = vunpack.c.l.b16 %v805
          %v824 = vunpack.c.h.b16 %v805
          %v825 = vunpack.c.l.b16 %v806
          %v826 = vunpack.c.h.b16 %v806
          %v827 = vpack.c.b16 %v815, %v815
          %v828 = vpack.c.b16 %v816, %v816
          %v829 = vpack.c.b16 %v817, %v817
          %v830 = vpack.c.b16 %v818, %v818
          %v831 = vpack.c.b16 %v819, %v819
          %v832 = vpack.c.b16 %v820, %v820
          %v833 = vpack.c.b16 %v821, %v821
          %v834 = vpack.c.b16 %v822, %v822
          %v835 = vpack.c.b16 %v823, %v823
          %v836 = vpack.c.b16 %v824, %v824
          %v837 = vpack.c.b16 %v825, %v825
          %v838 = vpack.c.b16 %v826, %v826
          %843 = vxpose.xlu0.c.b16.start [1/8] %v827, 128
          %844 = vxpose.xlu0.c.b16.cont [2/8] 0, 128
          %845 = vxpose.xlu0.c.b16.cont [3/8] 0, 128
          %846 = vxpose.xlu0.c.b16.cont [4/8] 0, 128
          %847 = vxpose.xlu0.c.b16.cont [5/8] 0, 128
          %848 = vxpose.xlu0.c.b16.cont [6/8] 0, 128
          %849 = vxpose.xlu0.c.b16.cont [7/8] 0, 128
          %850 = vxpose.xlu0.c.b16.end [8/8] 0, 128
          %v851 = vpop.trf.xlu0
          %v852 = vpop.trf.xlu0
          %v853 = vpop.trf.xlu0
          %v854 = vpop.trf.xlu0
          %v855 = vpop.trf.xlu0
          %v856 = vpop.trf.xlu0
          %v857 = vpop.trf.xlu0
          %v858 = vpop.trf.xlu0
          %859 = vxpose.xlu0.c.b16.start [1/8] %v828, 128
          %860 = vxpose.xlu0.c.b16.cont [2/8] 0, 128
          %861 = vxpose.xlu0.c.b16.cont [3/8] 0, 128
          %862 = vxpose.xlu0.c.b16.cont [4/8] 0, 128
          %863 = vxpose.xlu0.c.b16.cont [5/8] 0, 128
          %864 = vxpose.xlu0.c.b16.cont [6/8] 0, 128
          %865 = vxpose.xlu0.c.b16.cont [7/8] 0, 128
          %866 = vxpose.xlu0.c.b16.end [8/8] 0, 128
          %v867 = vpop.trf.xlu0
          %v868 = vpop.trf.xlu0
          %v869 = vpop.trf.xlu0
          %v870 = vpop.trf.xlu0
          %v871 = vpop.trf.xlu0
          %v872 = vpop.trf.xlu0
          %v873 = vpop.trf.xlu0
          %v874 = vpop.trf.xlu0
          %875 = vxpose.xlu0.c.b16.start [1/8] %v829, 128
          %876 = vxpose.xlu0.c.b16.cont [2/8] 0, 128
          %877 = vxpose.xlu0.c.b16.cont [3/8] 0, 128
          %878 = vxpose.xlu0.c.b16.cont [4/8] 0, 128
          %879 = vxpose.xlu0.c.b16.cont [5/8] 0, 128
          %880 = vxpose.xlu0.c.b16.cont [6/8] 0, 128
          %881 = vxpose.xlu0.c.b16.cont [7/8] 0, 128
          %882 = vxpose.xlu0.c.b16.end [8/8] 0, 128
          %v883 = vpop.trf.xlu0
          %v884 = vpop.trf.xlu0
          %v885 = vpop.trf.xlu0
          %v886 = vpop.trf.xlu0
          %v887 = vpop.trf.xlu0
          %v888 = vpop.trf.xlu0
          %v889 = vpop.trf.xlu0
          %v890 = vpop.trf.xlu0
          %891 = vxpose.xlu0.c.b16.start [1/8] %v830, 128
          %892 = vxpose.xlu0.c.b16.cont [2/8] 0, 128
          %893 = vxpose.xlu0.c.b16.cont [3/8] 0, 128
          %894 = vxpose.xlu0.c.b16.cont [4/8] 0, 128
          %895 = vxpose.xlu0.c.b16.cont [5/8] 0, 128
          %896 = vxpose.xlu0.c.b16.cont [6/8] 0, 128
          %897 = vxpose.xlu0.c.b16.cont [7/8] 0, 128
          %898 = vxpose.xlu0.c.b16.end [8/8] 0, 128
          %v899 = vpop.trf.xlu0
          %v900 = vpop.trf.xlu0
          %v901 = vpop.trf.xlu0
          %v902 = vpop.trf.xlu0
          %v903 = vpop.trf.xlu0
          %v904 = vpop.trf.xlu0
          %v905 = vpop.trf.xlu0
          %v906 = vpop.trf.xlu0
          %s907 = scalar_lea.vmem [#allocation7], %s785
          %v908 = vld [vmem:[%s907] sm:$0x1]
          %v910 = vlaneseq
          %v911 = vshrl.u32 %v910, 7
          %v912 = vsub.s32 0, %v911
          %v913 = vrot.slane %v908, %v912
          %vm915 = vcmask 64512
          %v917 = vsel %vm915, %v851, 0
          %vm919 = vcmask 1043456
          %v921 = vsel %vm919, %v831, 0
          %923 = vmatprep.subr.bf16.mxu0 0
          %924 = vmatpush1.bf16.msra.mxu0 0
          %925 = vmatprep.subr.bf16.mxu0 0
          %926 = vmatpush1.bf16.msra.mxu0 0
          %927 = vmatprep.subr.bf16.mxu0 0
          %928 = vmatpush1.bf16.msra.mxu0 0
          %929 = vmatprep.subr.bf16.mxu0 0
          %930 = vmatpush1.bf16.msra.mxu0 0
          %931 = vmatprep.subr.bf16.mxu0 0
          %932 = vmatpush1.bf16.msra.mxu0 0
          %933 = vmatprep.subr.bf16.mxu0 0
          %934 = vmatpush1.bf16.msra.mxu0 0
          %935 = vmatprep.subr.bf16.mxu0 0
          %936 = vmatpush1.bf16.msra.mxu0 0
          %937 = vmatprep.subr.bf16.mxu0 0
          %938 = vmatpush1.bf16.msra.mxu0 %v921
          %939 = vmatprep.subr.bf16.mxu0 0
          %940 = vmatpush2.bf16.msra.mxu0 0
          %941 = vmatprep.subr.bf16.mxu0 0
          %942 = vmatpush2.bf16.msra.mxu0 0
          %943 = vmatprep.subr.bf16.mxu0 0
          %944 = vmatpush2.bf16.msra.mxu0 0
          %945 = vmatprep.subr.bf16.mxu0 0
          %946 = vmatpush2.bf16.msra.mxu0 0
          %947 = vmatprep.subr.bf16.mxu0 0
          %948 = vmatpush2.bf16.msra.mxu0 0
          %949 = vmatprep.subr.bf16.mxu0 0
          %950 = vmatpush2.bf16.msra.mxu0 0
          %951 = vmatprep.subr.bf16.mxu0 0
          %952 = vmatpush2.bf16.msra.mxu0 0
          %953 = vmatprep.subr.bf16.mxu0 0
          %954 = vmatpush2.bf16.msra.mxu0 0
          %955 = vmatprep.mubr.bf16.mxu0 0
          %956 = vmatmul.mubr.bf16.gmra.mxu0 %v917
          %v957 = vpop.f32.mrf.mxu0
          %v958 = vadd.f32 %v913, %v957
          %v959 = vpop.f32.mrf.mxu0
          %v960 = vpop.f32.mrf.mxu0
          %v961 = vpop.f32.mrf.mxu0
          %962 = vdwg.mxu0
          %v964 = vsel %vm915, %v867, 0
          %v967 = vsel %vm919, %v832, 0
          %969 = vmatprep.subr.bf16.mxu0 0
          %970 = vmatpush1.bf16.msra.mxu0 0
          %971 = vmatprep.subr.bf16.mxu0 0
          %972 = vmatpush1.bf16.msra.mxu0 0
          %973 = vmatprep.subr.bf16.mxu0 0
          %974 = vmatpush1.bf16.msra.mxu0 0
          %975 = vmatprep.subr.bf16.mxu0 0
          %976 = vmatpush1.bf16.msra.mxu0 0
          %977 = vmatprep.subr.bf16.mxu0 0
          %978 = vmatpush1.bf16.msra.mxu0 0
          %979 = vmatprep.subr.bf16.mxu0 0
          %980 = vmatpush1.bf16.msra.mxu0 0
          %981 = vmatprep.subr.bf16.mxu0 0
          %982 = vmatpush1.bf16.msra.mxu0 0
          %983 = vmatprep.subr.bf16.mxu0 0
          %984 = vmatpush1.bf16.msra.mxu0 %v967
          %985 = vmatprep.subr.bf16.mxu0 0
          %986 = vmatpush2.bf16.msra.mxu0 0
          %987 = vmatprep.subr.bf16.mxu0 0
          %988 = vmatpush2.bf16.msra.mxu0 0
          %989 = vmatprep.subr.bf16.mxu0 0
          %990 = vmatpush2.bf16.msra.mxu0 0
          %991 = vmatprep.subr.bf16.mxu0 0
          %992 = vmatpush2.bf16.msra.mxu0 0
          %993 = vmatprep.subr.bf16.mxu0 0
          %994 = vmatpush2.bf16.msra.mxu0 0
          %995 = vmatprep.subr.bf16.mxu0 0
          %996 = vmatpush2.bf16.msra.mxu0 0
          %997 = vmatprep.subr.bf16.mxu0 0
          %998 = vmatpush2.bf16.msra.mxu0 0
          %999 = vmatprep.subr.bf16.mxu0 0
          %1000 = vmatpush2.bf16.msra.mxu0 0
          %1001 = vmatprep.mubr.bf16.mxu0 0
          %1002 = vmatmul.mubr.bf16.gmra.mxu0 %v964
          %v1003 = vpop.f32.mrf.mxu0
          %v1004 = vadd.f32 %v913, %v1003
          %v1005 = vpop.f32.mrf.mxu0
          %v1006 = vpop.f32.mrf.mxu0
          %v1007 = vpop.f32.mrf.mxu0
          %1008 = vdwg.mxu0
          %v1010 = vsel %vm915, %v883, 0
          %v1013 = vsel %vm919, %v833, 0
          %1015 = vmatprep.subr.bf16.mxu0 0
          %1016 = vmatpush1.bf16.msra.mxu0 0
          %1017 = vmatprep.subr.bf16.mxu0 0
          %1018 = vmatpush1.bf16.msra.mxu0 0
          %1019 = vmatprep.subr.bf16.mxu0 0
          %1020 = vmatpush1.bf16.msra.mxu0 0
          %1021 = vmatprep.subr.bf16.mxu0 0
          %1022 = vmatpush1.bf16.msra.mxu0 0
          %1023 = vmatprep.subr.bf16.mxu0 0
          %1024 = vmatpush1.bf16.msra.mxu0 0
          %1025 = vmatprep.subr.bf16.mxu0 0
          %1026 = vmatpush1.bf16.msra.mxu0 0
          %1027 = vmatprep.subr.bf16.mxu0 0
          %1028 = vmatpush1.bf16.msra.mxu0 0
          %1029 = vmatprep.subr.bf16.mxu0 0
          %1030 = vmatpush1.bf16.msra.mxu0 %v1013
          %1031 = vmatprep.subr.bf16.mxu0 0
          %1032 = vmatpush2.bf16.msra.mxu0 0
          %1033 = vmatprep.subr.bf16.mxu0 0
          %1034 = vmatpush2.bf16.msra.mxu0 0
          %1035 = vmatprep.subr.bf16.mxu0 0
          %1036 = vmatpush2.bf16.msra.mxu0 0
          %1037 = vmatprep.subr.bf16.mxu0 0
          %1038 = vmatpush2.bf16.msra.mxu0 0
          %1039 = vmatprep.subr.bf16.mxu0 0
          %1040 = vmatpush2.bf16.msra.mxu0 0
          %1041 = vmatprep.subr.bf16.mxu0 0
          %1042 = vmatpush2.bf16.msra.mxu0 0
          %1043 = vmatprep.subr.bf16.mxu0 0
          %1044 = vmatpush2.bf16.msra.mxu0 0
          %1045 = vmatprep.subr.bf16.mxu0 0
          %1046 = vmatpush2.bf16.msra.mxu0 0
          %1047 = vmatprep.mubr.bf16.mxu0 0
          %1048 = vmatmul.mubr.bf16.gmra.mxu0 %v1010
          %v1049 = vpop.f32.mrf.mxu0
          %v1050 = vadd.f32 %v913, %v1049
          %v1051 = vpop.f32.mrf.mxu0
          %v1052 = vpop.f32.mrf.mxu0
          %v1053 = vpop.f32.mrf.mxu0
          %1054 = vdwg.mxu0
          %v1056 = vsel %vm915, %v899, 0
          %v1059 = vsel %vm919, %v834, 0
          %1061 = vmatprep.subr.bf16.mxu0 0
          %1062 = vmatpush1.bf16.msra.mxu0 0
          %1063 = vmatprep.subr.bf16.mxu0 0
          %1064 = vmatpush1.bf16.msra.mxu0 0
          %1065 = vmatprep.subr.bf16.mxu0 0
          %1066 = vmatpush1.bf16.msra.mxu0 0
          %1067 = vmatprep.subr.bf16.mxu0 0
          %1068 = vmatpush1.bf16.msra.mxu0 0
          %1069 = vmatprep.subr.bf16.mxu0 0
          %1070 = vmatpush1.bf16.msra.mxu0 0
          %1071 = vmatprep.subr.bf16.mxu0 0
          %1072 = vmatpush1.bf16.msra.mxu0 0
          %1073 = vmatprep.subr.bf16.mxu0 0
          %1074 = vmatpush1.bf16.msra.mxu0 0
          %1075 = vmatprep.subr.bf16.mxu0 0
          %1076 = vmatpush1.bf16.msra.mxu0 %v1059
          %1077 = vmatprep.subr.bf16.mxu0 0
          %1078 = vmatpush2.bf16.msra.mxu0 0
          %1079 = vmatprep.subr.bf16.mxu0 0
          %1080 = vmatpush2.bf16.msra.mxu0 0
          %1081 = vmatprep.subr.bf16.mxu0 0
          %1082 = vmatpush2.bf16.msra.mxu0 0
          %1083 = vmatprep.subr.bf16.mxu0 0
          %1084 = vmatpush2.bf16.msra.mxu0 0
          %1085 = vmatprep.subr.bf16.mxu0 0
          %1086 = vmatpush2.bf16.msra.mxu0 0
          %1087 = vmatprep.subr.bf16.mxu0 0
          %1088 = vmatpush2.bf16.msra.mxu0 0
          %1089 = vmatprep.subr.bf16.mxu0 0
          %1090 = vmatpush2.bf16.msra.mxu0 0
          %1091 = vmatprep.subr.bf16.mxu0 0
          %1092 = vmatpush2.bf16.msra.mxu0 0
          %1093 = vmatprep.mubr.bf16.mxu0 0
          %1094 = vmatmul.mubr.bf16.gmra.mxu0 %v1056
          %v1095 = vpop.f32.mrf.mxu0
          %v1096 = vadd.f32 %v913, %v1095
          %v1097 = vpop.f32.mrf.mxu0
          %v1098 = vpop.f32.mrf.mxu0
          %v1099 = vpop.f32.mrf.mxu0
          %1100 = vdwg.mxu0
          %v1101 = vsel %vm915, %v958, -inf
          %1102 = vmax.xlane.f32.xlu0 %v1101
          %v1103 = vpop.xlane.xlu0 %1102
          %v1104 = vsel %vm915, %v1004, -inf
          %1105 = vmax.xlane.f32.xlu0 %v1104
          %v1106 = vpop.xlane.xlu0 %1105
          %v1107 = vsel %vm915, %v1050, -inf
          %1108 = vmax.xlane.f32.xlu0 %v1107
          %v1109 = vpop.xlane.xlu0 %1108
          %v1110 = vsel %vm915, %v1096, -inf
          %1111 = vmax.xlane.f32.xlu0 %v1110
          %v1112 = vpop.xlane.xlu0 %1111
          %v1113 = vsub.f32 %v958, %v1103
          %v1114 = vsub.f32 %v1004, %v1106
          %v1115 = vsub.f32 %v1050, %v1109
          %v1116 = vsub.f32 %v1096, %v1112
          %v1117 = vmul.f32 %v1113, 1.442695
          %v1118 = vpow.pop %v1117
          %v1119 = vmul.f32 %v1114, 1.442695
          %v1120 = vpow.pop %v1119
          %v1121 = vmul.f32 %v1115, 1.442695
          %v1122 = vpow.pop %v1121
          %v1123 = vmul.f32 %v1116, 1.442695
          %v1124 = vpow.pop %v1123
          %v1125 = vsel %vm915, %v1118, 0.0
          %1126 = vadd.xlane.f32.xlu0 %v1125
          %v1127 = vpop.xlane.xlu0 %1126
          %v1128 = vsel %vm915, %v1120, 0.0
          %1129 = vadd.xlane.f32.xlu0 %v1128
          %v1130 = vpop.xlane.xlu0 %1129
          %v1131 = vsel %vm915, %v1122, 0.0
          %1132 = vadd.xlane.f32.xlu0 %v1131
          %v1133 = vpop.xlane.xlu0 %1132
          %v1134 = vsel %vm915, %v1124, 0.0
          %1135 = vadd.xlane.f32.xlu0 %v1134
          %v1136 = vpop.xlane.xlu0 %1135
          %v1137 = vrcp.pop %v1127
          %v1138 = vrcp.pop %v1130
          %v1139 = vrcp.pop %v1133
          %v1140 = vrcp.pop %v1136
          %v1141 = vmul.f32 %v1118, %v1137
          %v1142 = vmul.f32 %v1120, %v1138
          %v1143 = vmul.f32 %v1122, %v1139
          %v1144 = vmul.f32 %v1124, %v1140
          %v1145 = vpack.c.bf16 %v1141, %v1141
          %v1146 = vpack.c.bf16 %v1142, %v1142
          %v1147 = vpack.c.bf16 %v1143, %v1143
          %v1148 = vpack.c.bf16 %v1144, %v1144
          %v1150 = vsel %vm915, %v835, 0
          %v1153 = vsel %vm915, %v1145, 0
          %1155 = vmatprep.subr.bf16.mxu0 0
          %1156 = vmatpush1.bf16.xpose.msra.mxu0 0
          %1157 = vmatprep.subr.bf16.mxu0 0
          %1158 = vmatpush1.bf16.xpose.msra.mxu0 0
          %1159 = vmatprep.subr.bf16.mxu0 0
          %1160 = vmatpush1.bf16.xpose.msra.mxu0 0
          %1161 = vmatprep.subr.bf16.mxu0 0
          %1162 = vmatpush1.bf16.xpose.msra.mxu0 0
          %1163 = vmatprep.subr.bf16.mxu0 0
          %1164 = vmatpush1.bf16.xpose.msra.mxu0 0
          %1165 = vmatprep.subr.bf16.mxu0 0
          %1166 = vmatpush1.bf16.xpose.msra.mxu0 0
          %1167 = vmatprep.subr.bf16.mxu0 0
          %1168 = vmatpush1.bf16.xpose.msra.mxu0 0
          %1169 = vmatprep.subr.bf16.mxu0 0
          %1170 = vmatpush1.bf16.xpose.msra.mxu0 %v1153
          %1171 = vmatprep.subr.bf16.mxu0 0
          %1172 = vmatpush2.bf16.xpose.msra.mxu0 0
          %1173 = vmatprep.subr.bf16.mxu0 0
          %1174 = vmatpush2.bf16.xpose.msra.mxu0 0
          %1175 = vmatprep.subr.bf16.mxu0 0
          %1176 = vmatpush2.bf16.xpose.msra.mxu0 0
          %1177 = vmatprep.subr.bf16.mxu0 0
          %1178 = vmatpush2.bf16.xpose.msra.mxu0 0
          %1179 = vmatprep.subr.bf16.mxu0 0
          %1180 = vmatpush2.bf16.xpose.msra.mxu0 0
          %1181 = vmatprep.subr.bf16.mxu0 0
          %1182 = vmatpush2.bf16.xpose.msra.mxu0 0
          %1183 = vmatprep.subr.bf16.mxu0 0
          %1184 = vmatpush2.bf16.xpose.msra.mxu0 0
          %1185 = vmatprep.subr.bf16.mxu0 0
          %1186 = vmatpush2.bf16.xpose.msra.mxu0 0
          %1187 = vmatprep.mubr.bf16.mxu0 0
          %1188 = vmatmul.mubr.bf16.gmra.mxu0 %v1150
          %v1189 = vpop.f32.mrf.mxu0
          %v1190 = vadd.f32 0.0, %v1189
          %v1191 = vpop.f32.mrf.mxu0
          %v1192 = vpop.f32.mrf.mxu0
          %v1193 = vpop.f32.mrf.mxu0
          %1194 = vdwg.mxu0
          %v1196 = vsel %vm915, %v836, 0
          %v1199 = vsel %vm915, %v1146, 0
          %1201 = vmatprep.subr.bf16.mxu0 0
          %1202 = vmatpush1.bf16.xpose.msra.mxu0 0
          %1203 = vmatprep.subr.bf16.mxu0 0
          %1204 = vmatpush1.bf16.xpose.msra.mxu0 0
          %1205 = vmatprep.subr.bf16.mxu0 0
          %1206 = vmatpush1.bf16.xpose.msra.mxu0 0
          %1207 = vmatprep.subr.bf16.mxu0 0
          %1208 = vmatpush1.bf16.xpose.msra.mxu0 0
          %1209 = vmatprep.subr.bf16.mxu0 0
          %1210 = vmatpush1.bf16.xpose.msra.mxu0 0
          %1211 = vmatprep.subr.bf16.mxu0 0
          %1212 = vmatpush1.bf16.xpose.msra.mxu0 0
          %1213 = vmatprep.subr.bf16.mxu0 0
          %1214 = vmatpush1.bf16.xpose.msra.mxu0 0
          %1215 = vmatprep.subr.bf16.mxu0 0
          %1216 = vmatpush1.bf16.xpose.msra.mxu0 %v1199
          %1217 = vmatprep.subr.bf16.mxu0 0
          %1218 = vmatpush2.bf16.xpose.msra.mxu0 0
          %1219 = vmatprep.subr.bf16.mxu0 0
          %1220 = vmatpush2.bf16.xpose.msra.mxu0 0
          %1221 = vmatprep.subr.bf16.mxu0 0
          %1222 = vmatpush2.bf16.xpose.msra.mxu0 0
          %1223 = vmatprep.subr.bf16.mxu0 0
          %1224 = vmatpush2.bf16.xpose.msra.mxu0 0
          %1225 = vmatprep.subr.bf16.mxu0 0
          %1226 = vmatpush2.bf16.xpose.msra.mxu0 0
          %1227 = vmatprep.subr.bf16.mxu0 0
          %1228 = vmatpush2.bf16.xpose.msra.mxu0 0
          %1229 = vmatprep.subr.bf16.mxu0 0
          %1230 = vmatpush2.bf16.xpose.msra.mxu0 0
          %1231 = vmatprep.subr.bf16.mxu0 0
          %1232 = vmatpush2.bf16.xpose.msra.mxu0 0
          %1233 = vmatprep.mubr.bf16.mxu0 0
          %1234 = vmatmul.mubr.bf16.gmra.mxu0 %v1196
          %v1235 = vpop.f32.mrf.mxu0
          %v1236 = vadd.f32 0.0, %v1235
          %v1237 = vpop.f32.mrf.mxu0
          %v1238 = vpop.f32.mrf.mxu0
          %v1239 = vpop.f32.mrf.mxu0
          %1240 = vdwg.mxu0
          %v1242 = vsel %vm915, %v837, 0
          %v1245 = vsel %vm915, %v1147, 0
          %1247 = vmatprep.subr.bf16.mxu0 0
          %1248 = vmatpush1.bf16.xpose.msra.mxu0 0
          %1249 = vmatprep.subr.bf16.mxu0 0
          %1250 = vmatpush1.bf16.xpose.msra.mxu0 0
          %1251 = vmatprep.subr.bf16.mxu0 0
          %1252 = vmatpush1.bf16.xpose.msra.mxu0 0
          %1253 = vmatprep.subr.bf16.mxu0 0
          %1254 = vmatpush1.bf16.xpose.msra.mxu0 0
          %1255 = vmatprep.subr.bf16.mxu0 0
          %1256 = vmatpush1.bf16.xpose.msra.mxu0 0
          %1257 = vmatprep.subr.bf16.mxu0 0
          %1258 = vmatpush1.bf16.xpose.msra.mxu0 0
          %1259 = vmatprep.subr.bf16.mxu0 0
          %1260 = vmatpush1.bf16.xpose.msra.mxu0 0
          %1261 = vmatprep.subr.bf16.mxu0 0
          %1262 = vmatpush1.bf16.xpose.msra.mxu0 %v1245
          %1263 = vmatprep.subr.bf16.mxu0 0
          %1264 = vmatpush2.bf16.xpose.msra.mxu0 0
          %1265 = vmatprep.subr.bf16.mxu0 0
          %1266 = vmatpush2.bf16.xpose.msra.mxu0 0
          %1267 = vmatprep.subr.bf16.mxu0 0
          %1268 = vmatpush2.bf16.xpose.msra.mxu0 0
          %1269 = vmatprep.subr.bf16.mxu0 0
          %1270 = vmatpush2.bf16.xpose.msra.mxu0 0
          %1271 = vmatprep.subr.bf16.mxu0 0
          %1272 = vmatpush2.bf16.xpose.msra.mxu0 0
          %1273 = vmatprep.subr.bf16.mxu0 0
          %1274 = vmatpush2.bf16.xpose.msra.mxu0 0
          %1275 = vmatprep.subr.bf16.mxu0 0
          %1276 = vmatpush2.bf16.xpose.msra.mxu0 0
          %1277 = vmatprep.subr.bf16.mxu0 0
          %1278 = vmatpush2.bf16.xpose.msra.mxu0 0
          %1279 = vmatprep.mubr.bf16.mxu0 0
          %1280 = vmatmul.mubr.bf16.gmra.mxu0 %v1242
          %v1281 = vpop.f32.mrf.mxu0
          %v1282 = vadd.f32 0.0, %v1281
          %v1283 = vpop.f32.mrf.mxu0
          %v1284 = vpop.f32.mrf.mxu0
          %v1285 = vpop.f32.mrf.mxu0
          %1286 = vdwg.mxu0
          %v1288 = vsel %vm915, %v838, 0
          %v1291 = vsel %vm915, %v1148, 0
          %1293 = vmatprep.subr.bf16.mxu0 0
          %1294 = vmatpush1.bf16.xpose.msra.mxu0 0
          %1295 = vmatprep.subr.bf16.mxu0 0
          %1296 = vmatpush1.bf16.xpose.msra.mxu0 0
          %1297 = vmatprep.subr.bf16.mxu0 0
          %1298 = vmatpush1.bf16.xpose.msra.mxu0 0
          %1299 = vmatprep.subr.bf16.mxu0 0
          %1300 = vmatpush1.bf16.xpose.msra.mxu0 0
          %1301 = vmatprep.subr.bf16.mxu0 0
          %1302 = vmatpush1.bf16.xpose.msra.mxu0 0
          %1303 = vmatprep.subr.bf16.mxu0 0
          %1304 = vmatpush1.bf16.xpose.msra.mxu0 0
          %1305 = vmatprep.subr.bf16.mxu0 0
          %1306 = vmatpush1.bf16.xpose.msra.mxu0 0
          %1307 = vmatprep.subr.bf16.mxu0 0
          %1308 = vmatpush1.bf16.xpose.msra.mxu0 %v1291
          %1309 = vmatprep.subr.bf16.mxu0 0
          %1310 = vmatpush2.bf16.xpose.msra.mxu0 0
          %1311 = vmatprep.subr.bf16.mxu0 0
          %1312 = vmatpush2.bf16.xpose.msra.mxu0 0
          %1313 = vmatprep.subr.bf16.mxu0 0
          %1314 = vmatpush2.bf16.xpose.msra.mxu0 0
          %1315 = vmatprep.subr.bf16.mxu0 0
          %1316 = vmatpush2.bf16.xpose.msra.mxu0 0
          %1317 = vmatprep.subr.bf16.mxu0 0
          %1318 = vmatpush2.bf16.xpose.msra.mxu0 0
          %1319 = vmatprep.subr.bf16.mxu0 0
          %1320 = vmatpush2.bf16.xpose.msra.mxu0 0
          %1321 = vmatprep.subr.bf16.mxu0 0
          %1322 = vmatpush2.bf16.xpose.msra.mxu0 0
          %1323 = vmatprep.subr.bf16.mxu0 0
          %1324 = vmatpush2.bf16.xpose.msra.mxu0 0
          %1325 = vmatprep.mubr.bf16.mxu0 0
          %1326 = vmatmul.mubr.bf16.gmra.mxu0 %v1288
          %v1327 = vpop.f32.mrf.mxu0
          %v1328 = vadd.f32 0.0, %v1327
          %v1329 = vpop.f32.mrf.mxu0
          %v1330 = vpop.f32.mrf.mxu0
          %v1331 = vpop.f32.mrf.mxu0
          %1332 = vdwg.mxu0
          %v1333 = vpack.c.bf16 %v1190, %v1190
          %v1334 = vpack.c.bf16 %v1236, %v1236
          %v1335 = vpack.c.bf16 %v1282, %v1282
          %v1336 = vpack.c.bf16 %v1328, %v1328
          %v1341 = vunpack.c.l.b16 %v1333
          %v1342 = vunpack.c.l.b16 %v1334
          %v1343 = vunpack.c.l.b16 %v1335
          %v1344 = vunpack.c.l.b16 %v1336
          %v1345 = vpack.c.b16 %v1342, %v1341
          %v1346 = vpack.c.b16 %v1344, %v1343
          %1349 = vxpose.xlu0.c.b16.start [1/8] %v1345, 128
          %1350 = vxpose.xlu0.c.b16.cont [2/8] %v1346, 128
          %1351 = vxpose.xlu0.c.b16.cont [3/8] 0, 128
          %1352 = vxpose.xlu0.c.b16.cont [4/8] 0, 128
          %1353 = vxpose.xlu0.c.b16.cont [5/8] 0, 128
          %1354 = vxpose.xlu0.c.b16.cont [6/8] 0, 128
          %1355 = vxpose.xlu0.c.b16.cont [7/8] 0, 128
          %1356 = vxpose.xlu0.c.b16.end [8/8] 0, 128
          %v1357 = vpop.trf.xlu0
          %v1358 = vpop.trf.xlu0
          %v1359 = vpop.trf.xlu0
          %v1360 = vpop.trf.xlu0
          %v1361 = vpop.trf.xlu0
          %v1362 = vpop.trf.xlu0
          %v1363 = vpop.trf.xlu0
          %v1364 = vpop.trf.xlu0
          %s1365 = smul.addr %s785, 4
          %s1366 = scalar_lea.vmem [#allocation3], %s1365
          %vm1367 = vcmask 257024
          %1368 = vst.msk [vmem:[%s1366] sm:$0xf] %vm1367, %v1357
        $region93: #{tpu_custom_call.1} parent=75 // loop_footer
          %s789 = sadd.s32 1, %s785
        $region94: #{tpu_custom_call.1} parent=75 // loop_footer_branch
          %784 = sbr.rel target = $region90
        $region95: #{tpu_custom_call.1} parent=75 // loop_exit
          _
        %v1369 = vld [vmem:[#allocation3] sm:$0xf]
        %v1370 = vld [vmem:[#allocation3 + $0x4] sm:$0xf]
        %v1371 = vld [vmem:[%s659] sm:$0xf]
        %v1372 = vld [vmem:[%s659 + $0x4] sm:$0xf]
        %v1373 = vld [vmem:[%s659 + $0x8] sm:$0xf]
        %v1374 = vld [vmem:[%s659 + $0xc] sm:$0xf]
        %v1375 = vld [vmem:[%s662] sm:$0x1]
        %v1377 = vlaneseq
        %v1378 = vshrl.u32 %v1377, 7
        %v1379 = vsub.s32 0, %v1378
        %v1380 = vrot.slane %v1375, %v1379
        %v1384 = vunpack.c.l.b16 %v1369
        %v1385 = vunpack.c.l.b16 %v1370
        %v1386 = vpack.c.b16 %v1385, %v1384
        %v1391 = vunpack.c.l.b16 %v1371
        %v1392 = vunpack.c.l.b16 %v1372
        %v1393 = vunpack.c.l.b16 %v1373
        %v1394 = vunpack.c.l.b16 %v1374
        %v1395 = vpack.c.b16 %v1392, %v1391
        %v1396 = vpack.c.b16 %v1394, %v1393
        %v1400 = vsel %vm728, %v1386, 0
        %1402 = vmatprep.subr.bf16.mxu0 0
        %1403 = vmatpush1.bf16.msra.mxu0 0
        %1404 = vmatprep.subr.bf16.mxu0 0
        %1405 = vmatpush1.bf16.msra.mxu0 0
        %1406 = vmatprep.subr.bf16.mxu0 0
        %1407 = vmatpush1.bf16.msra.mxu0 0
        %1408 = vmatprep.subr.bf16.mxu0 0
        %1409 = vmatpush1.bf16.msra.mxu0 0
        %1410 = vmatprep.subr.bf16.mxu0 0
        %1411 = vmatpush1.bf16.msra.mxu0 0
        %1412 = vmatprep.subr.bf16.mxu0 0
        %1413 = vmatpush1.bf16.msra.mxu0 0
        %1414 = vmatprep.subr.bf16.mxu0 0
        %1415 = vmatpush1.bf16.msra.mxu0 %v1396
        %1416 = vmatprep.subr.bf16.mxu0 0
        %1417 = vmatpush1.bf16.msra.mxu0 %v1395
        %1418 = vmatprep.subr.bf16.mxu0 0
        %1419 = vmatpush2.bf16.msra.mxu0 0
        %1420 = vmatprep.subr.bf16.mxu0 0
        %1421 = vmatpush2.bf16.msra.mxu0 0
        %1422 = vmatprep.subr.bf16.mxu0 0
        %1423 = vmatpush2.bf16.msra.mxu0 0
        %1424 = vmatprep.subr.bf16.mxu0 0
        %1425 = vmatpush2.bf16.msra.mxu0 0
        %1426 = vmatprep.subr.bf16.mxu0 0
        %1427 = vmatpush2.bf16.msra.mxu0 0
        %1428 = vmatprep.subr.bf16.mxu0 0
        %1429 = vmatpush2.bf16.msra.mxu0 0
        %1430 = vmatprep.subr.bf16.mxu0 0
        %1431 = vmatpush2.bf16.msra.mxu0 0
        %1432 = vmatprep.subr.bf16.mxu0 0
        %1433 = vmatpush2.bf16.msra.mxu0 0
        %1434 = vmatprep.mubr.bf16.mxu0 0
        %1435 = vmatmul.mubr.bf16.gmra.mxu0 %v1400
        %v1436 = vpop.f32.mrf.mxu0
        %v1437 = vadd.f32 %v1380, %v1436
        %v1438 = vpop.f32.mrf.mxu0
        %v1439 = vpop.f32.mrf.mxu0
        %v1440 = vadd.f32 %v1380, %v1439
        %v1441 = vpop.f32.mrf.mxu0
        %1442 = vdwg.mxu0
        %v1443 = vadd.f32 %v702, %v1437
        %v1444 = vadd.f32 %v703, %v1440
        %v1445 = vld [vmem:[%s665] sm:$0x1]
        %v1446 = vld [vmem:[%s668] sm:$0x1]
        %v1447 = vsel %vm728, %v1443, 0.0
        %1448 = vadd.xlane.f32.xlu0 %v1447
        %v1449 = vpop.xlane.xlu0 %1448
        %v1450 = vsel %vm728, %v1444, 0.0
        %1451 = vadd.xlane.f32.xlu0 %v1450
        %v1452 = vpop.xlane.xlu0 %1451
        %v1453 = vrcp.pop 32.0
        %v1454 = vmul.f32 %v1449, %v1453
        %v1455 = vmul.f32 %v1452, %v1453
        %v1456 = vsub.f32 %v1443, %v1454
        %v1457 = vsub.f32 %v1444, %v1455
        %v1458 = vmul.f32 %v1456, %v1456
        %v1459 = vmul.f32 %v1457, %v1457
        %v1460 = vsel %vm728, %v1458, 0.0
        %1461 = vadd.xlane.f32.xlu0 %v1460
        %v1462 = vpop.xlane.xlu0 %1461
        %v1463 = vsel %vm728, %v1459, 0.0
        %1464 = vadd.xlane.f32.xlu0 %v1463
        %v1465 = vpop.xlane.xlu0 %1464
        %v1466 = vmul.f32 %v1462, %v1453
        %v1467 = vmul.f32 %v1465, %v1453
        %v1468 = vadd.f32 %v1466, 1e-12
        %v1469 = vadd.f32 %v1467, 1e-12
        %v1470 = vrsqrt.pop %v1468
        %v1471 = vrsqrt.pop %v1469
        %v1472 = vmul.f32 %v1456, %v1470
        %v1473 = vmul.f32 %v1457, %v1471
        %v1475 = vlaneseq
        %v1476 = vshrl.u32 %v1475, 7
        %v1477 = vsub.s32 0, %v1476
        %v1478 = vrot.slane %v1445, %v1477
        %v1480 = vmul.f32 %v1472, %v1478
        %v1481 = vmul.f32 %v1473, %v1478
        %v1483 = vlaneseq
        %v1484 = vshrl.u32 %v1483, 7
        %v1485 = vsub.s32 0, %v1484
        %v1486 = vrot.slane %v1446, %v1485
        %v1488 = vadd.f32 %v1480, %v1486
        %v1489 = vadd.f32 %v1481, %v1486
        %v1490 = vpack.c.bf16 %v1489, %v1488
        %v1491 = vld [vmem:[%s673] sm:$0xf]
        %v1492 = vld [vmem:[%s673 + $0x4] sm:$0xf]
        %v1493 = vld [vmem:[%s673 + $0x8] sm:$0xf]
        %v1494 = vld [vmem:[%s673 + $0xc] sm:$0xf]
        %v1495 = vld [vmem:[%s676] sm:$0x1]
        %v1497 = vlaneseq
        %v1498 = vshrl.u32 %v1497, 7
        %v1499 = vsub.s32 0, %v1498
        %v1500 = vrot.slane %v1495, %v1499
        %v1506 = vunpack.c.l.b16 %v1491
        %v1507 = vunpack.c.l.b16 %v1492
        %v1508 = vunpack.c.l.b16 %v1493
        %v1509 = vunpack.c.l.b16 %v1494
        %v1510 = vpack.c.b16 %v1507, %v1506
        %v1511 = vpack.c.b16 %v1509, %v1508
        %v1515 = vsel %vm728, %v1490, 0
        %1517 = vmatprep.subr.bf16.mxu0 0
        %1518 = vmatpush1.bf16.msra.mxu0 0
        %1519 = vmatprep.subr.bf16.mxu0 0
        %1520 = vmatpush1.bf16.msra.mxu0 0
        %1521 = vmatprep.subr.bf16.mxu0 0
        %1522 = vmatpush1.bf16.msra.mxu0 0
        %1523 = vmatprep.subr.bf16.mxu0 0
        %1524 = vmatpush1.bf16.msra.mxu0 0
        %1525 = vmatprep.subr.bf16.mxu0 0
        %1526 = vmatpush1.bf16.msra.mxu0 0
        %1527 = vmatprep.subr.bf16.mxu0 0
        %1528 = vmatpush1.bf16.msra.mxu0 0
        %1529 = vmatprep.subr.bf16.mxu0 0
        %1530 = vmatpush1.bf16.msra.mxu0 %v1511
        %1531 = vmatprep.subr.bf16.mxu0 0
        %1532 = vmatpush1.bf16.msra.mxu0 %v1510
        %1533 = vmatprep.subr.bf16.mxu0 0
        %1534 = vmatpush2.bf16.msra.mxu0 0
        %1535 = vmatprep.subr.bf16.mxu0 0
        %1536 = vmatpush2.bf16.msra.mxu0 0
        %1537 = vmatprep.subr.bf16.mxu0 0
        %1538 = vmatpush2.bf16.msra.mxu0 0
        %1539 = vmatprep.subr.bf16.mxu0 0
        %1540 = vmatpush2.bf16.msra.mxu0 0
        %1541 = vmatprep.subr.bf16.mxu0 0
        %1542 = vmatpush2.bf16.msra.mxu0 0
        %1543 = vmatprep.subr.bf16.mxu0 0
        %1544 = vmatpush2.bf16.msra.mxu0 0
        %1545 = vmatprep.subr.bf16.mxu0 0
        %1546 = vmatpush2.bf16.msra.mxu0 0
        %1547 = vmatprep.subr.bf16.mxu0 0
        %1548 = vmatpush2.bf16.msra.mxu0 0
        %1549 = vmatprep.mubr.bf16.mxu0 0
        %1550 = vmatmul.mubr.bf16.gmra.mxu0 %v1515
        %v1551 = vpop.f32.mrf.mxu0
        %v1552 = vadd.f32 %v1500, %v1551
        %v1553 = vpop.f32.mrf.mxu0
        %v1554 = vpop.f32.mrf.mxu0
        %v1555 = vadd.f32 %v1500, %v1554
        %v1556 = vpop.f32.mrf.mxu0
        %1557 = vdwg.mxu0
        %v1558 = vmul.f32 %v1552, 0.5
        %v1559 = vmul.f32 %v1555, 0.5
        %v1560 = vmul.f32 %v1552, 0.044715
        %v1561 = vmul.f32 %v1555, 0.044715
        %v1562 = vmul.f32 %v1560, %v1552
        %v1563 = vmul.f32 %v1561, %v1555
        %v1564 = vmul.f32 %v1562, %v1552
        %v1565 = vmul.f32 %v1563, %v1555
        %v1566 = vadd.f32 %v1552, %v1564
        %v1567 = vadd.f32 %v1555, %v1565
        %v1568 = vmul.f32 %v1566, 0.7978846
        %v1569 = vmul.f32 %v1567, 0.7978846
        %v1570 = vtanh.pop %v1568
        %v1571 = vtanh.pop %v1569
        %v1572 = vadd.f32 %v1570, 1.0
        %v1573 = vadd.f32 %v1571, 1.0
        %v1574 = vmul.f32 %v1558, %v1572
        %v1575 = vmul.f32 %v1559, %v1573
        %v1576 = vpack.c.bf16 %v1575, %v1574
        %v1577 = vld [vmem:[%s681] sm:$0xf]
        %v1578 = vld [vmem:[%s681 + $0x4] sm:$0xf]
        %v1579 = vld [vmem:[%s681 + $0x8] sm:$0xf]
        %v1580 = vld [vmem:[%s681 + $0xc] sm:$0xf]
        %v1581 = vld [vmem:[%s681 + $0x10] sm:$0xf]
        %v1582 = vld [vmem:[%s681 + $0x14] sm:$0xf]
        %v1583 = vld [vmem:[%s681 + $0x18] sm:$0xf]
        %v1584 = vld [vmem:[%s681 + $0x1c] sm:$0xf]
        %v1585 = vld [vmem:[%s684] sm:$0x1]
        %v1587 = vlaneseq
        %v1588 = vshrl.u32 %v1587, 7
        %v1589 = vsub.s32 0, %v1588
        %v1590 = vrot.slane %v1585, %v1589
        %v1600 = vunpack.c.l.b16 %v1577
        %v1601 = vunpack.c.l.b16 %v1578
        %v1602 = vunpack.c.l.b16 %v1579
        %v1603 = vunpack.c.l.b16 %v1580
        %v1604 = vunpack.c.l.b16 %v1581
        %v1605 = vunpack.c.l.b16 %v1582
        %v1606 = vunpack.c.l.b16 %v1583
        %v1607 = vunpack.c.l.b16 %v1584
        %v1608 = vpack.c.b16 %v1601, %v1600
        %v1609 = vpack.c.b16 %v1603, %v1602
        %v1610 = vpack.c.b16 %v1605, %v1604
        %v1611 = vpack.c.b16 %v1607, %v1606
        %vm1616 = vcmask 523264
        %v1618 = vsel %vm1616, %v1576, 0
        %1620 = vmatprep.subr.bf16.mxu0 0
        %1621 = vmatpush1.bf16.msra.mxu0 0
        %1622 = vmatprep.subr.bf16.mxu0 0
        %1623 = vmatpush1.bf16.msra.mxu0 0
        %1624 = vmatprep.subr.bf16.mxu0 0
        %1625 = vmatpush1.bf16.msra.mxu0 0
        %1626 = vmatprep.subr.bf16.mxu0 0
        %1627 = vmatpush1.bf16.msra.mxu0 0
        %1628 = vmatprep.subr.bf16.mxu0 0
        %1629 = vmatpush1.bf16.msra.mxu0 %v1611
        %1630 = vmatprep.subr.bf16.mxu0 0
        %1631 = vmatpush1.bf16.msra.mxu0 %v1610
        %1632 = vmatprep.subr.bf16.mxu0 0
        %1633 = vmatpush1.bf16.msra.mxu0 %v1609
        %1634 = vmatprep.subr.bf16.mxu0 0
        %1635 = vmatpush1.bf16.msra.mxu0 %v1608
        %1636 = vmatprep.subr.bf16.mxu0 0
        %1637 = vmatpush2.bf16.msra.mxu0 0
        %1638 = vmatprep.subr.bf16.mxu0 0
        %1639 = vmatpush2.bf16.msra.mxu0 0
        %1640 = vmatprep.subr.bf16.mxu0 0
        %1641 = vmatpush2.bf16.msra.mxu0 0
        %1642 = vmatprep.subr.bf16.mxu0 0
        %1643 = vmatpush2.bf16.msra.mxu0 0
        %1644 = vmatprep.subr.bf16.mxu0 0
        %1645 = vmatpush2.bf16.msra.mxu0 0
        %1646 = vmatprep.subr.bf16.mxu0 0
        %1647 = vmatpush2.bf16.msra.mxu0 0
        %1648 = vmatprep.subr.bf16.mxu0 0
        %1649 = vmatpush2.bf16.msra.mxu0 0
        %1650 = vmatprep.subr.bf16.mxu0 0
        %1651 = vmatpush2.bf16.msra.mxu0 0
        %1652 = vmatprep.mubr.bf16.mxu0 0
        %1653 = vmatmul.mubr.bf16.gmra.mxu0 %v1618
        %v1654 = vpop.f32.mrf.mxu0
        %v1655 = vadd.f32 %v1590, %v1654
        %v1656 = vpop.f32.mrf.mxu0
        %v1657 = vpop.f32.mrf.mxu0
        %v1658 = vadd.f32 %v1590, %v1657
        %v1659 = vpop.f32.mrf.mxu0
        %1660 = vdwg.mxu0
        %v1661 = vadd.f32 %v1488, %v1655
        %v1662 = vadd.f32 %v1489, %v1658
        %v1663 = vld [vmem:[%s687] sm:$0x1]
        %v1664 = vld [vmem:[%s690] sm:$0x1]
        %v1665 = vsel %vm728, %v1661, 0.0
        %1666 = vadd.xlane.f32.xlu0 %v1665
        %v1667 = vpop.xlane.xlu0 %1666
        %v1668 = vsel %vm728, %v1662, 0.0
        %1669 = vadd.xlane.f32.xlu0 %v1668
        %v1670 = vpop.xlane.xlu0 %1669
        %v1671 = vmul.f32 %v1667, %v1453
        %v1672 = vmul.f32 %v1670, %v1453
        %v1673 = vsub.f32 %v1661, %v1671
        %v1674 = vsub.f32 %v1662, %v1672
        %v1675 = vmul.f32 %v1673, %v1673
        %v1676 = vmul.f32 %v1674, %v1674
        %v1677 = vsel %vm728, %v1675, 0.0
        %1678 = vadd.xlane.f32.xlu0 %v1677
        %v1679 = vpop.xlane.xlu0 %1678
        %v1680 = vsel %vm728, %v1676, 0.0
        %1681 = vadd.xlane.f32.xlu0 %v1680
        %v1682 = vpop.xlane.xlu0 %1681
        %v1683 = vmul.f32 %v1679, %v1453
        %v1684 = vmul.f32 %v1682, %v1453
        %v1685 = vadd.f32 %v1683, 1e-12
        %v1686 = vadd.f32 %v1684, 1e-12
        %v1687 = vrsqrt.pop %v1685
        %v1688 = vrsqrt.pop %v1686
        %v1689 = vmul.f32 %v1673, %v1687
        %v1690 = vmul.f32 %v1674, %v1688
        %v1692 = vlaneseq
        %v1693 = vshrl.u32 %v1692, 7
        %v1694 = vsub.s32 0, %v1693
        %v1695 = vrot.slane %v1663, %v1694
        %v1697 = vmul.f32 %v1689, %v1695
        %v1698 = vmul.f32 %v1690, %v1695
        %v1700 = vlaneseq
        %v1701 = vshrl.u32 %v1700, 7
        %v1702 = vsub.s32 0, %v1701
        %v1703 = vrot.slane %v1664, %v1702
        %v1705 = vadd.f32 %v1697, %v1703
        %v1706 = vadd.f32 %v1698, %v1703
        %1707 = vst.msk [vmem:[#allocation9] sm:$0xff] %vm728, %v1705
        %1708 = vst.msk [vmem:[#allocation9 + $0x8] sm:$0xff] %vm728, %v1706
        // Predicated region
        $region96: #{tpu_custom_call.1} parent=75 // pred_check
          %p1709 = pneg %p422
        $region97: #{tpu_custom_call.1} parent=75 // pred_check_branch
          %1711 = sbr.rel (%p1709) target = $region99
        $region98: #{tpu_custom_call.1} parent=75 // pred_region
          %s1712 = smul.u32 2, %s32
          %s1714 = ssub.s32 256, 256
          %1715 = vsyncadd [#allocation6], %s1714
          %s1716 = smul.addr %s1712, 128
          %s1717 = scalar_lea.hbm %s14, %s1716
          %s1718 = sshll.u32 [#allocation9], 4
          %s1719 = int_to_ptr.vmem [resolvable:$true] %s1718
          %1724 = dma.vmem_to_hbm [thread:$0]  %s1719, 256, %s1717, [#allocation6], 128, 128, 8
        $region99: #{tpu_custom_call.1} parent=75 // pred_fallthru
          _
        // Predicated region
        $region100: #{tpu_custom_call.1} parent=75 // pred_check
          %p1725 = pneg %p422
        $region101: #{tpu_custom_call.1} parent=75 // pred_check_branch
          %1727 = sbr.rel (%p1725) target = $region103
        $region102: #{tpu_custom_call.1} parent=75 // pred_region
          %1728 = dma.done [#allocation6], 256
        $region103: #{tpu_custom_call.1} parent=75 // pred_fallthru
          _
      $region76: #{tpu_custom_call.1} parent=5 // pred_fallthru
        _
      %p1729 = scmp.le.s32.totalorder 2, %s23
      // Predicated region
      $region104: #{tpu_custom_call.1} parent=5 // pred_check
        %p1730 = pneg %p1729
      $region105: #{tpu_custom_call.1} parent=5 // pred_check_branch
        %1732 = sbr.rel (%p1730) target = $region107
      $region106: #{tpu_custom_call.1} parent=5 // pred_region
        %s1733 = ssub.s32 %s23, 2
      $region107: #{tpu_custom_call.1} parent=5 // pred_fallthru
        _
    $region6: #{tpu_custom_call.1} parent=1 // loop_footer
      %s27 = sadd.s32 1, %s23
    $region7: #{tpu_custom_call.1} parent=1 // loop_footer_branch
      %22 = sbr.rel target = $region3
    $region8: #{tpu_custom_call.1} parent=1 // loop_exit
      _
    %1734 = vsyncpa [#allocation5], 1
    %s1735 = scalar_lea.sflag [#allocation5], 1
    %1736 = vsyncpa %s1735, 1
    %1737 = vsyncpa [#allocation8], 1
    %1738 = vsyncpa [#allocation6], 1
    %s1739 = scalar_lea.sflag [#allocation6], 1
    %1740 = vsyncpa %s1739, 1

</llo_original>
